<compile_context>
chip_gen: v7x
topology: tpu7x:2x2x1
jax: 0.10.0
libtpu: 0.0.40
codegen_flags: <defaults>
</compile_context>

<pallas_src>
import functools

import jax
import jax.numpy as jnp
from jax import lax
from jax.experimental import pallas as pl
from jax.experimental.pallas import tpu as pltpu

HIDDEN_DIM = 350          # fixed inside the PyTorch module
LN_EPS = 1e-5             # nn.LayerNorm default
LANE = 128
SUBLANE = 8


def _round_up(n, m):
    return ((n + m - 1) // m) * m


HIDDEN_PAD = _round_up(HIDDEN_DIM, LANE)   # 384 = 3 x 128, lane-aligned


# ----------------------------- fused Pallas kernel ---------------------------

def _fused_mlp_kernel(x_ref, w0_ref, b0_ref, wh_ref, bh_ref, g_ref, bt_ref,
                      wl_ref, bl_ref, o_ref, *,
                      plan_hidden, final_ln_idx, h_real):
    """One batch tile: the whole Linear+SiLU chain with fused LayerNorms."""
    inv_n = 1.0 / float(h_real)

    def layernorm(h, ln_idx):
        # Pad lanes of h are exactly zero, so plain lane sums are the real
        # sums; gamma=beta=0 in pad lanes keeps them zero afterwards.
        gamma = g_ref[ln_idx]                     # (1, H_pad)
        beta = bt_ref[ln_idx]
        mean = jnp.sum(h, axis=-1, keepdims=True) * inv_n
        mean_sq = jnp.sum(h * h, axis=-1, keepdims=True) * inv_n
        inv = lax.rsqrt(mean_sq - mean * mean + LN_EPS)
        return (h - mean) * inv * gamma + beta

    def linear(h, w_bf16, b_f32):
        # bf16 x bf16 on the MXU, f32 accumulate, f32 bias add.
        acc = jnp.dot(h.astype(jnp.bfloat16), w_bf16,
                      preferred_element_type=jnp.float32)
        return acc + b_f32

    # Layer 0: Linear(in, H) + SiLU
    h = linear(x_ref[...], w0_ref[...], b0_ref[...])
    h = h * jax.nn.sigmoid(h)

    # Hidden Linear(H, H) + SiLU layers; LayerNorm fused where the module has one.
    for w_idx, ln_idx in enumerate(plan_hidden):
        if ln_idx is not None:
            h = layernorm(h, ln_idx)
        hh = linear(h, wh_ref[w_idx], bh_ref[w_idx])
        h = hh * jax.nn.sigmoid(hh)

    if final_ln_idx is not None:
        h = layernorm(h, final_ln_idx)

    # Final Linear(H, out), no activation.  Output lanes padded to 128 so the
    # store is lane-dense (unmasked); the wrapper slices back to out_dim.
    o_ref[...] = linear(h, wl_ref[...], bl_ref[...]).astype(o_ref.dtype)


@functools.partial(jax.jit, static_argnames=("plan_hidden", "final_ln_idx",
                                             "out_dim", "block_batch"))
def mlp_forward(x, w0, b0, wh, bh, g, bt, wl, bl, *,
                plan_hidden, final_ln_idx, out_dim, block_batch=None):
    """Batch-tiled grid; weights stay VMEM-resident across all grid steps."""
    batch, in_dim = x.shape
    h_pad = w0.shape[1]
    out_pad = wl.shape[1]

    tb = min(256, _round_up(batch, SUBLANE)) if block_batch is None else block_batch
    batch_pad = _round_up(batch, tb)
    xp = x.astype(jnp.float32)
    if batch_pad != batch:                       # cheap / no-op for aligned batch
        xp = jnp.pad(xp, ((0, batch_pad - batch), (0, 0)))

    n_hidden = len(plan_hidden)
    flops = 2 * batch_pad * (in_dim * h_pad + n_hidden * h_pad * h_pad
                             + h_pad * out_pad)
    transcendentals = batch_pad * h_pad * (1 + n_hidden)
    bytes_accessed = ((w0.size + wh.size + wl.size) * 2
                      + (b0.size + bh.size + g.size + bt.size + bl.size) * 4
                      + xp.size * 4 + batch_pad * out_pad * 4)

    kernel = functools.partial(
        _fused_mlp_kernel,
        plan_hidden=plan_hidden,
        final_ln_idx=final_ln_idx,
        h_real=HIDDEN_DIM,
    )
    weight_spec = pl.BlockSpec(memory_space=pltpu.VMEM)   # whole array, loaded once

    out = pl.pallas_call(
        kernel,
        out_shape=jax.ShapeDtypeStruct((batch_pad, out_pad), jnp.float32),
        grid_spec=pltpu.PrefetchScalarGridSpec(
            num_scalar_prefetch=0,
            grid=(batch_pad // tb,),
            in_specs=[pl.BlockSpec((tb, in_dim), lambda i: (i, 0))]
                     + [weight_spec] * 8,
            out_specs=pl.BlockSpec((tb, out_pad), lambda i: (i, 0)),
        ),
        compiler_params=pltpu.CompilerParams(
            dimension_semantics=("parallel",)),
        cost_estimate=pl.CostEstimate(flops=flops,
                                      transcendentals=transcendentals,
                                      bytes_accessed=bytes_accessed),
    )(xp, w0, b0, wh, bh, g, bt, wl, bl)
    return out[:batch, :out_dim]


# ----------------------------- parameter construction ------------------------

def init_mlp_params(key, in_dim, out_dim, n_layers, use_layer_norm):
    """Same layer sequence as the PyTorch module (f32, unpadded)."""
    layers = []

    def linear_params(key, fan_in, fan_out):
        kw, kb = jax.random.split(key)
        bound = 1.0 / float(fan_in) ** 0.5
        w = jax.random.uniform(kw, (fan_in, fan_out), jnp.float32, -bound, bound)
        b = jax.random.uniform(kb, (fan_out,), jnp.float32, -bound, bound)
        return w, b

    key, sub = jax.random.split(key)
    w, b = linear_params(sub, in_dim, HIDDEN_DIM)
    layers.append(("linear", w, b, True))                    # Linear + SiLU

    for i in range(n_layers - 2):
        if (i + 2) % 3 == 0 and use_layer_norm:
            layers.append(("ln",
                           jnp.ones((HIDDEN_DIM,), jnp.float32),
                           jnp.zeros((HIDDEN_DIM,), jnp.float32)))
        key, sub = jax.random.split(key)
        w, b = linear_params(sub, HIDDEN_DIM, HIDDEN_DIM)
        layers.append(("linear", w, b, True))                # Linear + SiLU

    if use_layer_norm:
        layers.append(("ln",
                       jnp.ones((HIDDEN_DIM,), jnp.float32),
                       jnp.zeros((HIDDEN_DIM,), jnp.float32)))

    key, sub = jax.random.split(key)
    w, b = linear_params(sub, HIDDEN_DIM, out_dim)
    layers.append(("linear", w, b, False))                   # final Linear
    return layers


def pack_params(layers, in_dim, out_dim):
    """Zero-pad hidden/out dims to lane-aligned shapes, cast weights to bf16,
    stack hidden weights, build the static layer plan."""
    n_lin = sum(1 for l in layers if l[0] == "linear")
    out_pad = _round_up(out_dim, LANE)
    h_pad = HIDDEN_PAD
    hp = h_pad - HIDDEN_DIM

    plan_hidden = []          # per hidden Linear: preceding-LN index or None
    final_ln_idx = None
    pending_ln = None
    ln_count = 0
    lin_count = 0
    hidden_ws, hidden_bs, gammas, betas = [], [], [], []
    w0 = b0 = wl = bl = None

    for l in layers:
        if l[0] == "ln":
            _, gam, bet = l
            gammas.append(jnp.pad(gam, (0, hp)).reshape(1, h_pad))
            betas.append(jnp.pad(bet, (0, hp)).reshape(1, h_pad))
            pending_ln = ln_count
            ln_count += 1
        else:
            _, w, b, _ = l
            lin_count += 1
            if lin_count == 1:
                # in_dim deliberately NOT padded (x keeps its true width).
                w0 = jnp.pad(w, ((0, 0), (0, hp))).astype(jnp.bfloat16)
                b0 = jnp.pad(b, (0, hp)).reshape(1, h_pad)
            elif lin_count == n_lin:
                final_ln_idx = pending_ln
                wl = jnp.pad(w, ((0, hp), (0, out_pad - out_dim))).astype(jnp.bfloat16)
                bl = jnp.pad(b, (0, out_pad - out_dim)).reshape(1, out_pad)
            else:
                plan_hidden.append(pending_ln)
                hidden_ws.append(jnp.pad(w, ((0, hp), (0, hp))).astype(jnp.bfloat16))
                hidden_bs.append(jnp.pad(b, (0, hp)).reshape(1, h_pad))
            pending_ln = None

    if hidden_ws:
        wh = jnp.stack(hidden_ws)                 # (L, H_pad, H_pad) bf16
        bh = jnp.stack(hidden_bs)                 # (L, 1, H_pad) f32
    else:                                         # n_layers == 2: dummies, never indexed
        wh = jnp.zeros((1, h_pad, h_pad), jnp.bfloat16)
        bh = jnp.zeros((1, 1, h_pad), jnp.float32)
    if gammas:
        g = jnp.stack(gammas)                     # (n_ln, 1, H_pad)
        bt = jnp.stack(betas)
    else:
        g = jnp.zeros((1, 1, h_pad), jnp.float32)
        bt = jnp.zeros((1, 1, h_pad), jnp.float32)

    arrays = (w0, b0, wh, bh, g, bt, wl, bl)
    static = dict(plan_hidden=tuple(plan_hidden),
                  final_ln_idx=final_ln_idx,
                  out_dim=out_dim)
    return arrays, static


# ----------------------------- reference (plain JAX) -------------------------

def mlp_forward_ref(layers, x):
    """Pure-JAX reference mirroring the kernel's numerics: bf16 weights and
    bf16 activation operands on the matmuls, f32 accumulate, f32 elsewhere."""
    for l in layers:
        if l[0] == "linear":
            _, w, b, apply_silu = l
            x = jnp.dot(x.astype(jnp.bfloat16), w.astype(jnp.bfloat16),
                        preferred_element_type=jnp.float32) + b
            if apply_silu:
                x = x * jax.nn.sigmoid(x)
        else:
            _, gam, bet = l
            mean = jnp.mean(x, axis=-1, keepdims=True)
            var = jnp.mean(jnp.square(x - mean), axis=-1, keepdims=True)
            x = (x - mean) * lax.rsqrt(var + LN_EPS) * gam + bet
    return x


# ----------------------------- main -------------------------------------------

if __name__ == "__main__":
    in_dim, out_dim, n_layers = 32, 16, 5
    use_layer_norm = True
    batch = 8

    key = jax.random.PRNGKey(0)
    k_params, k_x = jax.random.split(key)
    layers = init_mlp_params(k_params, in_dim, out_dim, n_layers, use_layer_norm)
    x = jax.random.normal(k_x, (batch, in_dim), jnp.float32)

    arrays, static = pack_params(layers, in_dim, out_dim)
    out = mlp_forward(x, *arrays, **static)
    out = jax.block_until_ready(out)

    ref = mlp_forward_ref(layers, x)
    assert out.shape == (batch, out_dim), out.shape
    max_err = float(jnp.max(jnp.abs(out - ref)))
    assert jnp.allclose(out, ref, atol=2e-3, rtol=2e-3), max_err

    print("KERNEL_OK")
</pallas_src>

<mosaic_0001>
module attributes {stable_mosaic.version = 11 : i64} {
  func.func @_fused_mlp_kernel(%arg0: i32, %arg1: memref<8x32xf32, #tpu.memory_space<vmem>>, %arg2: memref<32x384xbf16, #tpu.memory_space<vmem>>, %arg3: memref<1x384xf32, #tpu.memory_space<vmem>>, %arg4: memref<3x384x384xbf16, #tpu.memory_space<vmem>>, %arg5: memref<3x1x384xf32, #tpu.memory_space<vmem>>, %arg6: memref<2x1x384xf32, #tpu.memory_space<vmem>>, %arg7: memref<2x1x384xf32, #tpu.memory_space<vmem>>, %arg8: memref<384x128xbf16, #tpu.memory_space<vmem>>, %arg9: memref<1x128xf32, #tpu.memory_space<vmem>>, %arg10: memref<8x128xf32, #tpu.memory_space<vmem>>) attributes {dimension_semantics = [#tpu.dimension_semantics<parallel>], iteration_bounds = array<i64: 1>, scalar_prefetch = 0 : i64, scratch_operands = 0 : i64, tpu.core_type = #tpu.core_type<tc>, window_params = [{transform_indices = @transform_0, window_bounds = array<i64: 8, 32>}, {pipeline_mode = #tpu.pipeline_mode<synchronous>, transform_indices = @transform_1, window_bounds = array<i64: 32, 384>}, {pipeline_mode = #tpu.pipeline_mode<synchronous>, transform_indices = @transform_2, window_bounds = array<i64: 1, 384>}, {pipeline_mode = #tpu.pipeline_mode<synchronous>, transform_indices = @transform_3, window_bounds = array<i64: 3, 384, 384>}, {pipeline_mode = #tpu.pipeline_mode<synchronous>, transform_indices = @transform_4, window_bounds = array<i64: 3, 1, 384>}, {pipeline_mode = #tpu.pipeline_mode<synchronous>, transform_indices = @transform_5, window_bounds = array<i64: 2, 1, 384>}, {pipeline_mode = #tpu.pipeline_mode<synchronous>, transform_indices = @transform_6, window_bounds = array<i64: 2, 1, 384>}, {pipeline_mode = #tpu.pipeline_mode<synchronous>, transform_indices = @transform_7, window_bounds = array<i64: 384, 128>}, {pipeline_mode = #tpu.pipeline_mode<synchronous>, transform_indices = @transform_8, window_bounds = array<i64: 1, 128>}, {transform_indices = @transform_9, window_bounds = array<i64: 8, 128>}]} {
    %c0 = arith.constant 0 : index
    %c0_0 = arith.constant 0 : index
    %0 = vector.load %arg1[%c0, %c0_0] : memref<8x32xf32, #tpu.memory_space<vmem>>, vector<8x32xf32>
    %c0_1 = arith.constant 0 : index
    %c0_2 = arith.constant 0 : index
    %1 = vector.load %arg2[%c0_1, %c0_2] : memref<32x384xbf16, #tpu.memory_space<vmem>>, vector<32x384xbf16>
    %c0_3 = arith.constant 0 : index
    %c0_4 = arith.constant 0 : index
    %2 = vector.load %arg3[%c0_3, %c0_4] : memref<1x384xf32, #tpu.memory_space<vmem>>, vector<1x384xf32>
    %3 = arith.truncf %0 : vector<8x32xf32> to vector<8x32xbf16>
    %cst = arith.constant dense<0.000000e+00> : vector<8x384xf32>
    %4 = tpu.matmul %3, %1, %cst {dimension_numbers = #tpu.dot_dimension_numbers<[1], [0], [0], [1], [0, 0, 1, 1], [], []>} : vector<8x32xbf16>, vector<32x384xbf16>, vector<8x384xf32> -> vector<8x384xf32>
    %5 = vector.broadcast %2 : vector<1x384xf32> to vector<8x384xf32>
    %6 = arith.addf %4, %5 : vector<8x384xf32>
    %7 = arith.negf %6 : vector<8x384xf32>
    %8 = math.exp %7 : vector<8x384xf32>
    %cst_5 = arith.constant 1.000000e+00 : f32
    %9 = vector.broadcast %cst_5 : f32 to vector<8x384xf32>
    %10 = arith.addf %9, %8 : vector<8x384xf32>
    %11 = arith.divf %9, %10 : vector<8x384xf32>
    %12 = arith.mulf %6, %11 : vector<8x384xf32>
    %c0_6 = arith.constant 0 : index
    %c0_7 = arith.constant 0 : index
    %c0_8 = arith.constant 0 : index
    %13 = vector.load %arg4[%c0_6, %c0_7, %c0_8] : memref<3x384x384xbf16, #tpu.memory_space<vmem>>, vector<1x384x384xbf16>
    %14 = vector.shape_cast %13 : vector<1x384x384xbf16> to vector<384x384xbf16>
    %c0_9 = arith.constant 0 : index
    %c0_10 = arith.constant 0 : index
    %c0_11 = arith.constant 0 : index
    %15 = vector.load %arg5[%c0_9, %c0_10, %c0_11] : memref<3x1x384xf32, #tpu.memory_space<vmem>>, vector<1x1x384xf32>
    %16 = vector.shape_cast %15 : vector<1x1x384xf32> to vector<1x384xf32>
    %17 = arith.truncf %12 : vector<8x384xf32> to vector<8x384xbf16>
    %cst_12 = arith.constant dense<0.000000e+00> : vector<8x384xf32>
    %18 = tpu.matmul %17, %14, %cst_12 {dimension_numbers = #tpu.dot_dimension_numbers<[1], [0], [0], [1], [0, 0, 1, 1], [], []>} : vector<8x384xbf16>, vector<384x384xbf16>, vector<8x384xf32> -> vector<8x384xf32>
    %19 = vector.broadcast %16 : vector<1x384xf32> to vector<8x384xf32>
    %20 = arith.addf %18, %19 : vector<8x384xf32>
    %21 = arith.negf %20 : vector<8x384xf32>
    %22 = math.exp %21 : vector<8x384xf32>
    %cst_13 = arith.constant 1.000000e+00 : f32
    %23 = vector.broadcast %cst_13 : f32 to vector<8x384xf32>
    %24 = arith.addf %23, %22 : vector<8x384xf32>
    %25 = arith.divf %23, %24 : vector<8x384xf32>
    %26 = arith.mulf %20, %25 : vector<8x384xf32>
    %c0_14 = arith.constant 0 : index
    %c0_15 = arith.constant 0 : index
    %c0_16 = arith.constant 0 : index
    %27 = vector.load %arg6[%c0_14, %c0_15, %c0_16] : memref<2x1x384xf32, #tpu.memory_space<vmem>>, vector<1x1x384xf32>
    %28 = vector.shape_cast %27 : vector<1x1x384xf32> to vector<1x384xf32>
    %c0_17 = arith.constant 0 : index
    %c0_18 = arith.constant 0 : index
    %c0_19 = arith.constant 0 : index
    %29 = vector.load %arg7[%c0_17, %c0_18, %c0_19] : memref<2x1x384xf32, #tpu.memory_space<vmem>>, vector<1x1x384xf32>
    %30 = vector.shape_cast %29 : vector<1x1x384xf32> to vector<1x384xf32>
    %cst_20 = arith.constant dense<0.000000e+00> : vector<8xf32>
    %31 = vector.multi_reduction <add>, %26, %cst_20 [1] : vector<8x384xf32> to vector<8xf32>
    %32 = vector.shape_cast %31 : vector<8xf32> to vector<8x1xf32>
    %cst_21 = arith.constant 0.00285714283 : f32
    %33 = vector.broadcast %cst_21 : f32 to vector<8x1xf32>
    %34 = arith.mulf %32, %33 : vector<8x1xf32>
    %35 = arith.mulf %26, %26 : vector<8x384xf32>
    %cst_22 = arith.constant dense<0.000000e+00> : vector<8xf32>
    %36 = vector.multi_reduction <add>, %35, %cst_22 [1] : vector<8x384xf32> to vector<8xf32>
    %37 = vector.shape_cast %36 : vector<8xf32> to vector<8x1xf32>
    %cst_23 = arith.constant 0.00285714283 : f32
    %38 = vector.broadcast %cst_23 : f32 to vector<8x1xf32>
    %39 = arith.mulf %37, %38 : vector<8x1xf32>
    %40 = arith.mulf %34, %34 : vector<8x1xf32>
    %41 = arith.subf %39, %40 : vector<8x1xf32>
    %cst_24 = arith.constant 9.99999974E-6 : f32
    %42 = vector.broadcast %cst_24 : f32 to vector<8x1xf32>
    %43 = arith.addf %41, %42 : vector<8x1xf32>
    %44 = math.rsqrt %43 : vector<8x1xf32>
    %45 = vector.broadcast %34 : vector<8x1xf32> to vector<8x384xf32>
    %46 = arith.subf %26, %45 : vector<8x384xf32>
    %47 = vector.broadcast %44 : vector<8x1xf32> to vector<8x384xf32>
    %48 = arith.mulf %46, %47 : vector<8x384xf32>
    %49 = vector.broadcast %28 : vector<1x384xf32> to vector<8x384xf32>
    %50 = arith.mulf %48, %49 : vector<8x384xf32>
    %51 = vector.broadcast %30 : vector<1x384xf32> to vector<8x384xf32>
    %52 = arith.addf %50, %51 : vector<8x384xf32>
    %c1 = arith.constant 1 : index
    %c0_25 = arith.constant 0 : index
    %c0_26 = arith.constant 0 : index
    %53 = vector.load %arg4[%c1, %c0_25, %c0_26] : memref<3x384x384xbf16, #tpu.memory_space<vmem>>, vector<1x384x384xbf16>
    %54 = vector.shape_cast %53 : vector<1x384x384xbf16> to vector<384x384xbf16>
    %c1_27 = arith.constant 1 : index
    %c0_28 = arith.constant 0 : index
    %c0_29 = arith.constant 0 : index
    %55 = vector.load %arg5[%c1_27, %c0_28, %c0_29] : memref<3x1x384xf32, #tpu.memory_space<vmem>>, vector<1x1x384xf32>
    %56 = vector.shape_cast %55 : vector<1x1x384xf32> to vector<1x384xf32>
    %57 = arith.truncf %52 : vector<8x384xf32> to vector<8x384xbf16>
    %cst_30 = arith.constant dense<0.000000e+00> : vector<8x384xf32>
    %58 = tpu.matmul %57, %54, %cst_30 {dimension_numbers = #tpu.dot_dimension_numbers<[1], [0], [0], [1], [0, 0, 1, 1], [], []>} : vector<8x384xbf16>, vector<384x384xbf16>, vector<8x384xf32> -> vector<8x384xf32>
    %59 = vector.broadcast %56 : vector<1x384xf32> to vector<8x384xf32>
    %60 = arith.addf %58, %59 : vector<8x384xf32>
    %61 = arith.negf %60 : vector<8x384xf32>
    %62 = math.exp %61 : vector<8x384xf32>
    %cst_31 = arith.constant 1.000000e+00 : f32
    %63 = vector.broadcast %cst_31 : f32 to vector<8x384xf32>
    %64 = arith.addf %63, %62 : vector<8x384xf32>
    %65 = arith.divf %63, %64 : vector<8x384xf32>
    %66 = arith.mulf %60, %65 : vector<8x384xf32>
    %c2 = arith.constant 2 : index
    %c0_32 = arith.constant 0 : index
    %c0_33 = arith.constant 0 : index
    %67 = vector.load %arg4[%c2, %c0_32, %c0_33] : memref<3x384x384xbf16, #tpu.memory_space<vmem>>, vector<1x384x384xbf16>
    %68 = vector.shape_cast %67 : vector<1x384x384xbf16> to vector<384x384xbf16>
    %c2_34 = arith.constant 2 : index
    %c0_35 = arith.constant 0 : index
    %c0_36 = arith.constant 0 : index
    %69 = vector.load %arg5[%c2_34, %c0_35, %c0_36] : memref<3x1x384xf32, #tpu.memory_space<vmem>>, vector<1x1x384xf32>
    %70 = vector.shape_cast %69 : vector<1x1x384xf32> to vector<1x384xf32>
    %71 = arith.truncf %66 : vector<8x384xf32> to vector<8x384xbf16>
    %cst_37 = arith.constant dense<0.000000e+00> : vector<8x384xf32>
    %72 = tpu.matmul %71, %68, %cst_37 {dimension_numbers = #tpu.dot_dimension_numbers<[1], [0], [0], [1], [0, 0, 1, 1], [], []>} : vector<8x384xbf16>, vector<384x384xbf16>, vector<8x384xf32> -> vector<8x384xf32>
    %73 = vector.broadcast %70 : vector<1x384xf32> to vector<8x384xf32>
    %74 = arith.addf %72, %73 : vector<8x384xf32>
    %75 = arith.negf %74 : vector<8x384xf32>
    %76 = math.exp %75 : vector<8x384xf32>
    %cst_38 = arith.constant 1.000000e+00 : f32
    %77 = vector.broadcast %cst_38 : f32 to vector<8x384xf32>
    %78 = arith.addf %77, %76 : vector<8x384xf32>
    %79 = arith.divf %77, %78 : vector<8x384xf32>
    %80 = arith.mulf %74, %79 : vector<8x384xf32>
    %c1_39 = arith.constant 1 : index
    %c0_40 = arith.constant 0 : index
    %c0_41 = arith.constant 0 : index
    %81 = vector.load %arg6[%c1_39, %c0_40, %c0_41] : memref<2x1x384xf32, #tpu.memory_space<vmem>>, vector<1x1x384xf32>
    %82 = vector.shape_cast %81 : vector<1x1x384xf32> to vector<1x384xf32>
    %c1_42 = arith.constant 1 : index
    %c0_43 = arith.constant 0 : index
    %c0_44 = arith.constant 0 : index
    %83 = vector.load %arg7[%c1_42, %c0_43, %c0_44] : memref<2x1x384xf32, #tpu.memory_space<vmem>>, vector<1x1x384xf32>
    %84 = vector.shape_cast %83 : vector<1x1x384xf32> to vector<1x384xf32>
    %cst_45 = arith.constant dense<0.000000e+00> : vector<8xf32>
    %85 = vector.multi_reduction <add>, %80, %cst_45 [1] : vector<8x384xf32> to vector<8xf32>
    %86 = vector.shape_cast %85 : vector<8xf32> to vector<8x1xf32>
    %cst_46 = arith.constant 0.00285714283 : f32
    %87 = vector.broadcast %cst_46 : f32 to vector<8x1xf32>
    %88 = arith.mulf %86, %87 : vector<8x1xf32>
    %89 = arith.mulf %80, %80 : vector<8x384xf32>
    %cst_47 = arith.constant dense<0.000000e+00> : vector<8xf32>
    %90 = vector.multi_reduction <add>, %89, %cst_47 [1] : vector<8x384xf32> to vector<8xf32>
    %91 = vector.shape_cast %90 : vector<8xf32> to vector<8x1xf32>
    %cst_48 = arith.constant 0.00285714283 : f32
    %92 = vector.broadcast %cst_48 : f32 to vector<8x1xf32>
    %93 = arith.mulf %91, %92 : vector<8x1xf32>
    %94 = arith.mulf %88, %88 : vector<8x1xf32>
    %95 = arith.subf %93, %94 : vector<8x1xf32>
    %cst_49 = arith.constant 9.99999974E-6 : f32
    %96 = vector.broadcast %cst_49 : f32 to vector<8x1xf32>
    %97 = arith.addf %95, %96 : vector<8x1xf32>
    %98 = math.rsqrt %97 : vector<8x1xf32>
    %99 = vector.broadcast %88 : vector<8x1xf32> to vector<8x384xf32>
    %100 = arith.subf %80, %99 : vector<8x384xf32>
    %101 = vector.broadcast %98 : vector<8x1xf32> to vector<8x384xf32>
    %102 = arith.mulf %100, %101 : vector<8x384xf32>
    %103 = vector.broadcast %82 : vector<1x384xf32> to vector<8x384xf32>
    %104 = arith.mulf %102, %103 : vector<8x384xf32>
    %105 = vector.broadcast %84 : vector<1x384xf32> to vector<8x384xf32>
    %106 = arith.addf %104, %105 : vector<8x384xf32>
    %c0_50 = arith.constant 0 : index
    %c0_51 = arith.constant 0 : index
    %107 = vector.load %arg8[%c0_50, %c0_51] : memref<384x128xbf16, #tpu.memory_space<vmem>>, vector<384x128xbf16>
    %c0_52 = arith.constant 0 : index
    %c0_53 = arith.constant 0 : index
    %108 = vector.load %arg9[%c0_52, %c0_53] : memref<1x128xf32, #tpu.memory_space<vmem>>, vector<1x128xf32>
    %109 = arith.truncf %106 : vector<8x384xf32> to vector<8x384xbf16>
    %cst_54 = arith.constant dense<0.000000e+00> : vector<8x128xf32>
    %110 = tpu.matmul %109, %107, %cst_54 {dimension_numbers = #tpu.dot_dimension_numbers<[1], [0], [0], [1], [0, 0, 1, 1], [], []>} : vector<8x384xbf16>, vector<384x128xbf16>, vector<8x128xf32> -> vector<8x128xf32>
    %111 = vector.broadcast %108 : vector<1x128xf32> to vector<8x128xf32>
    %112 = arith.addf %110, %111 : vector<8x128xf32>
    %c0_55 = arith.constant 0 : index
    %c0_56 = arith.constant 0 : index
    %113 = vector.load %arg10[%c0_55, %c0_56] : memref<8x128xf32, #tpu.memory_space<vmem>>, vector<8x128xf32>
    tpu.vector_store %arg10[%c0_55, %c0_56], %112 {strides = array<i32>} : memref<8x128xf32, #tpu.memory_space<vmem>>, vector<8x128xf32>,
    return
  }
  func.func @transform_0(%arg0: i32) -> (i32, i32) {
    %c0_i32 = arith.constant 0 : i32
    %c0_i32_0 = arith.constant 0 : i32
    return %arg0, %c0_i32 : i32, i32
  }
  func.func @transform_1(%arg0: i32) -> (i32, i32) {
    %c0_i32 = arith.constant 0 : i32
    %c0_i32_0 = arith.constant 0 : i32
    %c0_i32_1 = arith.constant 0 : i32
    return %c0_i32, %c0_i32_0 : i32, i32
  }
  func.func @transform_2(%arg0: i32) -> (i32, i32) {
    %c0_i32 = arith.constant 0 : i32
    %c0_i32_0 = arith.constant 0 : i32
    %c0_i32_1 = arith.constant 0 : i32
    return %c0_i32, %c0_i32_0 : i32, i32
  }
  func.func @transform_3(%arg0: i32) -> (i32, i32, i32) {
    %c0_i32 = arith.constant 0 : i32
    %c0_i32_0 = arith.constant 0 : i32
    %c0_i32_1 = arith.constant 0 : i32
    %c0_i32_2 = arith.constant 0 : i32
    return %c0_i32, %c0_i32_0, %c0_i32_1 : i32, i32, i32
  }
  func.func @transform_4(%arg0: i32) -> (i32, i32, i32) {
    %c0_i32 = arith.constant 0 : i32
    %c0_i32_0 = arith.constant 0 : i32
    %c0_i32_1 = arith.constant 0 : i32
    %c0_i32_2 = arith.constant 0 : i32
    return %c0_i32, %c0_i32_0, %c0_i32_1 : i32, i32, i32
  }
  func.func @transform_5(%arg0: i32) -> (i32, i32, i32) {
    %c0_i32 = arith.constant 0 : i32
    %c0_i32_0 = arith.constant 0 : i32
    %c0_i32_1 = arith.constant 0 : i32
    %c0_i32_2 = arith.constant 0 : i32
    return %c0_i32, %c0_i32_0, %c0_i32_1 : i32, i32, i32
  }
  func.func @transform_6(%arg0: i32) -> (i32, i32, i32) {
    %c0_i32 = arith.constant 0 : i32
    %c0_i32_0 = arith.constant 0 : i32
    %c0_i32_1 = arith.constant 0 : i32
    %c0_i32_2 = arith.constant 0 : i32
    return %c0_i32, %c0_i32_0, %c0_i32_1 : i32, i32, i32
  }
  func.func @transform_7(%arg0: i32) -> (i32, i32) {
    %c0_i32 = arith.constant 0 : i32
    %c0_i32_0 = arith.constant 0 : i32
    %c0_i32_1 = arith.constant 0 : i32
    return %c0_i32, %c0_i32_0 : i32, i32
  }
  func.func @transform_8(%arg0: i32) -> (i32, i32) {
    %c0_i32 = arith.constant 0 : i32
    %c0_i32_0 = arith.constant 0 : i32
    %c0_i32_1 = arith.constant 0 : i32
    return %c0_i32, %c0_i32_0 : i32, i32
  }
  func.func @transform_9(%arg0: i32) -> (i32, i32) {
    %c0_i32 = arith.constant 0 : i32
    %c0_i32_0 = arith.constant 0 : i32
    return %arg0, %c0_i32 : i32, i32
  }
}

</mosaic_0001>

<llo_original>
// kernel: mlp_forward.1
$region0: #{mlp_forward.1}
  #allocation0 [shape = 'u32[]', space=smem, size = 0x4, offset = 0x4, fixed_abs, tag = 'smem constant byte address 0x4 - core index']
  #allocation1 [shape = 'u32[144,128]{1,0:T(1,128)}', space=vmem, size = 0x12000, scoped, tag = 'internal scratch']
  %s0 = inlined_call_operand.hbm [shape: f32[8,32], index: 0, kind: input, shape index: {}]
  %s1 = inlined_call_operand.hbm [shape: bf16[32,384], index: 1, kind: input, shape index: {}]
  %s2 = inlined_call_operand.hbm [shape: f32[1,384], index: 2, kind: input, shape index: {}]
  %s3 = inlined_call_operand.hbm [shape: bf16[3,384,384], index: 3, kind: input, shape index: {}]
  %s4 = inlined_call_operand.vmem [shape: f32[3,1,384], index: 4, kind: input, shape index: {}]
  %s5 = inlined_call_operand.vmem [shape: f32[2,1,384], index: 5, kind: input, shape index: {}]
  %s6 = inlined_call_operand.vmem [shape: f32[2,1,384], index: 6, kind: input, shape index: {}]
  %s7 = inlined_call_operand.hbm [shape: bf16[384,128], index: 7, kind: input, shape index: {}]
  %s8 = inlined_call_operand.vmem [shape: f32[1,128], index: 8, kind: input, shape index: {}]
  %s9 = inlined_call_operand.hbm [shape: f32[8,128], index: 9, kind: output, shape index: {}]
  %s10 = sld [smem:[#allocation0]]
  $region66: #{mlp_forward.1} parent=0
    _
  %s12 = ssub.s32 1, %s10
  %s13 = scalar_select 0, %s12, %s10
  $region1: #{mlp_forward.1} parent=0
    #allocation2 [shape = 'u8[4096]{0}', space=vmem, size = 0x1000, scoped, tag = 'input window, operand 0, single buffered']
    #allocation3 [shape = 's32[1]{0}', space=sflag, size = 0x4, scoped, tag = 'scoped memory for mlp_forward.1']
    #allocation4 [shape = 's32[1]{0}', space=sflag, size = 0x4, scoped, tag = 'scoped memory for mlp_forward.1']
    #allocation5 [shape = 'u8[24576]{0}', space=vmem, size = 0x6000, scoped, tag = 'input window, operand 1, single buffered']
    #allocation6 [shape = 's32[1]{0}', space=sflag, size = 0x4, scoped, tag = 'scoped memory for mlp_forward.1']
    #allocation7 [shape = 'u8[1536]{0}', space=vmem, size = 0x800, scoped, tag = 'input window, operand 2, single buffered']
    #allocation8 [shape = 'u8[884736]{0}', space=vmem, size = 0xd8000, scoped, tag = 'input window, operand 3, single buffered']
    #allocation9 [shape = 's32[1]{0}', space=sflag, size = 0x4, scoped, tag = 'scoped memory for mlp_forward.1']
    #allocation10 [shape = 'u8[98304]{0}', space=vmem, size = 0x18000, scoped, tag = 'input window, operand 7, single buffered']
    #allocation11 [shape = 'u8[4096]{0}', space=vmem, size = 0x1000, scoped, tag = 'output window, operand 0, single buffered']
    %14 = vsyncpa [#allocation3], 0
    %15 = vsyncpa [#allocation6], 0
    %16 = vsyncpa [#allocation9], 0
    %17 = vsyncpa [#allocation4], 0
    // Predicated region
    $region2: #{mlp_forward.1} parent=1 // pred_check
      _
    $region3: #{mlp_forward.1} parent=1 // pred_check_branch
      %19 = sbr.rel (0) target = $region5
    $region4: #{mlp_forward.1} parent=1 // pred_region
      %s21 = ssub.s32 128, 128
      %22 = vsyncadd [#allocation3], %s21
      %s24 = sshll.u32 [#allocation2], 4
      %s25 = int_to_ptr.vmem [resolvable:$true] %s24
      %27 = dma.hbm_to_vmem [thread:$0]  %s0, 128, %s25, [#allocation3]
    $region5: #{mlp_forward.1} parent=1 // pred_fallthru
      _
    // Predicated region
    $region6: #{mlp_forward.1} parent=1 // pred_check
      _
    $region7: #{mlp_forward.1} parent=1 // pred_check_branch
      %29 = sbr.rel (0) target = $region9
    $region8: #{mlp_forward.1} parent=1 // pred_region
      %s31 = ssub.s32 768, 768
      %32 = vsyncadd [#allocation6], %s31
      %s33 = sshll.u32 [#allocation5], 4
      %s34 = int_to_ptr.vmem [resolvable:$true] %s33
      %39 = dma.hbm_to_vmem [thread:$0]  %s1, 768, %s34, [#allocation6], 192, 192, 12
    $region9: #{mlp_forward.1} parent=1 // pred_fallthru
      _
    // Predicated region
    $region10: #{mlp_forward.1} parent=1 // pred_check
      _
    $region11: #{mlp_forward.1} parent=1 // pred_check_branch
      %41 = sbr.rel (0) target = $region13
    $region12: #{mlp_forward.1} parent=1 // pred_region
      %s43 = ssub.s32 48, 48
      %44 = vsyncadd [#allocation6], %s43
      %s46 = sshll.u32 [#allocation7], 4
      %s47 = int_to_ptr.vmem [resolvable:$true] %s46
      %49 = dma.hbm_to_vmem [thread:$0]  %s2, 48, %s47, [#allocation6]
    $region13: #{mlp_forward.1} parent=1 // pred_fallthru
      _
    // Predicated region
    $region14: #{mlp_forward.1} parent=1 // pred_check
      _
    $region15: #{mlp_forward.1} parent=1 // pred_check_branch
      %51 = sbr.rel (0) target = $region17
    $region16: #{mlp_forward.1} parent=1 // pred_region
      %s53 = ssub.s32 27648, 27648
      %54 = vsyncadd [#allocation9], %s53
      %s55 = sshll.u32 [#allocation8], 4
      %s56 = int_to_ptr.vmem [resolvable:$true] %s55
      %61 = dma.hbm_to_vmem [thread:$0]  %s3, 27648, %s56, [#allocation9], 192, 192, 12
    $region17: #{mlp_forward.1} parent=1 // pred_fallthru
      _
    // Predicated region
    $region18: #{mlp_forward.1} parent=1 // pred_check
      _
    $region19: #{mlp_forward.1} parent=1 // pred_check_branch
      %63 = sbr.rel (0) target = $region21
    $region20: #{mlp_forward.1} parent=1 // pred_region
      _
    $region21: #{mlp_forward.1} parent=1 // pred_fallthru
      _
    // Predicated region
    $region22: #{mlp_forward.1} parent=1 // pred_check
      _
    $region23: #{mlp_forward.1} parent=1 // pred_check_branch
      %65 = sbr.rel (0) target = $region25
    $region24: #{mlp_forward.1} parent=1 // pred_region
      _
    $region25: #{mlp_forward.1} parent=1 // pred_fallthru
      _
    // Predicated region
    $region26: #{mlp_forward.1} parent=1 // pred_check
      _
    $region27: #{mlp_forward.1} parent=1 // pred_check_branch
      %67 = sbr.rel (0) target = $region29
    $region28: #{mlp_forward.1} parent=1 // pred_region
      _
    $region29: #{mlp_forward.1} parent=1 // pred_fallthru
      _
    // Predicated region
    $region30: #{mlp_forward.1} parent=1 // pred_check
      _
    $region31: #{mlp_forward.1} parent=1 // pred_check_branch
      %69 = sbr.rel (0) target = $region33
    $region32: #{mlp_forward.1} parent=1 // pred_region
      %s71 = ssub.s32 3072, 3072
      %72 = vsyncadd [#allocation9], %s71
      %s73 = sshll.u32 [#allocation10], 4
      %s74 = int_to_ptr.vmem [resolvable:$true] %s73
      %79 = dma.hbm_to_vmem [thread:$0]  %s7, 3072, %s74, [#allocation9], 64, 64, 4
    $region33: #{mlp_forward.1} parent=1 // pred_fallthru
      _
    // Predicated region
    $region34: #{mlp_forward.1} parent=1 // pred_check
      _
    $region35: #{mlp_forward.1} parent=1 // pred_check_branch
      %81 = sbr.rel (0) target = $region37
    $region36: #{mlp_forward.1} parent=1 // pred_region
      _
    $region37: #{mlp_forward.1} parent=1 // pred_fallthru
      _
    // Predicated region
    $region38: #{mlp_forward.1} parent=1 // pred_check
      _
    $region39: #{mlp_forward.1} parent=1 // pred_check_branch
      %83 = sbr.rel (0) target = $region41
    $region40: #{mlp_forward.1} parent=1 // pred_region
      %84 = dma.done [#allocation3], 128
    $region41: #{mlp_forward.1} parent=1 // pred_fallthru
      _
    // Predicated region
    $region42: #{mlp_forward.1} parent=1 // pred_check
      _
    $region43: #{mlp_forward.1} parent=1 // pred_check_branch
      %86 = sbr.rel (0) target = $region45
    $region44: #{mlp_forward.1} parent=1 // pred_region
      %87 = dma.done [#allocation6], 768
    $region45: #{mlp_forward.1} parent=1 // pred_fallthru
      _
    // Predicated region
    $region46: #{mlp_forward.1} parent=1 // pred_check
      _
    $region47: #{mlp_forward.1} parent=1 // pred_check_branch
      %89 = sbr.rel (0) target = $region49
    $region48: #{mlp_forward.1} parent=1 // pred_region
      %90 = dma.done [#allocation6], 48
    $region49: #{mlp_forward.1} parent=1 // pred_fallthru
      _
    // Predicated region
    $region50: #{mlp_forward.1} parent=1 // pred_check
      _
    $region51: #{mlp_forward.1} parent=1 // pred_check_branch
      %92 = sbr.rel (0) target = $region53
    $region52: #{mlp_forward.1} parent=1 // pred_region
      %93 = dma.done [#allocation9], 27648
    $region53: #{mlp_forward.1} parent=1 // pred_fallthru
      _
    // Predicated region
    $region54: #{mlp_forward.1} parent=1 // pred_check
      _
    $region55: #{mlp_forward.1} parent=1 // pred_check_branch
      %95 = sbr.rel (0) target = $region57
    $region56: #{mlp_forward.1} parent=1 // pred_region
      %96 = dma.done [#allocation9], 3072
    $region57: #{mlp_forward.1} parent=1 // pred_fallthru
      _
    %v98 = vld [vmem:[#allocation2] sm:$0xff]
    %v99 = vld [vmem:[#allocation5] sm:$0xff]
    %v100 = vld [vmem:[#allocation5 + $0x8] sm:$0xf]
    %v101 = vld [vmem:[#allocation5 + $0xc] sm:$0xff]
    %v102 = vld [vmem:[#allocation5 + $0x14] sm:$0xf]
    %v103 = vld [vmem:[#allocation5 + $0x18] sm:$0xff]
    %v104 = vld [vmem:[#allocation5 + $0x20] sm:$0xf]
    %v105 = vld [vmem:[#allocation5 + $0x24] sm:$0xff]
    %v106 = vld [vmem:[#allocation5 + $0x2c] sm:$0xf]
    %v107 = vld [vmem:[#allocation7] sm:$0x7]
    %v108 = vpack.c.bf16 %v98, %v98
    %v110 = vlaneseq
    %v111 = vshrl.u32 %v110, 7
    %v112 = vsub.s32 0, %v111
    %v113 = vrot.slane %v107, %v112
    %v114 = vlaneseq
    %v115 = vshrl.u32 %v114, 7
    %v116 = vsub.s32 1, %v115
    %v117 = vrot.slane %v107, %v116
    %v118 = vlaneseq
    %v119 = vshrl.u32 %v118, 7
    %v120 = vsub.s32 2, %v119
    %v121 = vrot.slane %v107, %v120
    %v133 = vunpack.c.l.b16 %v99
    %v134 = vunpack.c.h.b16 %v99
    %v135 = vunpack.c.l.b16 %v100
    %v136 = vunpack.c.l.b16 %v101
    %v137 = vunpack.c.h.b16 %v101
    %v138 = vunpack.c.l.b16 %v102
    %v139 = vunpack.c.l.b16 %v103
    %v140 = vunpack.c.h.b16 %v103
    %v141 = vunpack.c.l.b16 %v104
    %v142 = vunpack.c.l.b16 %v105
    %v143 = vunpack.c.h.b16 %v105
    %v144 = vunpack.c.l.b16 %v106
    %v145 = vpack.c.b16 %v136, %v133
    %v146 = vpack.c.b16 %v137, %v134
    %v147 = vpack.c.b16 %v138, %v135
    %v148 = vpack.c.b16 %v142, %v139
    %v149 = vpack.c.b16 %v143, %v140
    %v150 = vpack.c.b16 %v144, %v141
    %vm157 = vcmask 261120
    %v159 = vsel %vm157, %v108, 0
    %161 = vmatprep.subr.bf16.mxu0 %v146
    %162 = vmatpush1.bf16.msra.mxu0 %v145
    %163 = vmatprep.subr.bf16.mxu0 %v149
    %164 = vmatpush1.bf16.msra.mxu0 %v148
    %165 = vmatprep.subr.bf16.mxu0 0
    %166 = vmatpush1.bf16.msra.mxu0 0
    %167 = vmatprep.subr.bf16.mxu0 0
    %168 = vmatpush1.bf16.msra.mxu0 0
    %169 = vmatprep.subr.bf16.mxu0 0
    %170 = vmatpush1.bf16.msra.mxu0 0
    %171 = vmatprep.subr.bf16.mxu0 0
    %172 = vmatpush1.bf16.msra.mxu0 0
    %173 = vmatprep.subr.bf16.mxu0 0
    %174 = vmatpush1.bf16.msra.mxu0 0
    %175 = vmatprep.subr.bf16.mxu0 0
    %176 = vmatpush1.bf16.msra.mxu0 0
    %177 = vmatprep.subr.bf16.mxu0 0
    %178 = vmatpush1.bf16.msra.mxu0 0
    %179 = vmatprep.subr.bf16.mxu0 0
    %180 = vmatpush1.bf16.msra.mxu0 0
    %181 = vmatprep.subr.bf16.mxu0 0
    %182 = vmatpush1.bf16.msra.mxu0 0
    %183 = vmatprep.subr.bf16.mxu0 0
    %184 = vmatpush1.bf16.msra.mxu0 0
    %185 = vmatprep.subr.bf16.mxu0 0
    %186 = vmatpush1.bf16.msra.mxu0 0
    %187 = vmatprep.subr.bf16.mxu0 0
    %188 = vmatpush1.bf16.msra.mxu0 0
    %189 = vmatprep.subr.bf16.mxu0 0
    %190 = vmatpush1.bf16.msra.mxu0 0
    %191 = vmatprep.subr.bf16.mxu0 0
    %192 = vmatpush1.bf16.msra.mxu0 0
    %193 = vmatprep.mubr.bf16.mxu0 0
    %194 = vmatmul.mubr.bf16.gmra.mrb[0].mxu0 %v159
    %v195 = vpop.f32.mrb[0].mxu0
    %v196 = vadd.f32 %v113, %v195
    %v197 = vpop.f32.mrb[0].mxu0
    %v198 = vadd.f32 %v117, %v197
    %v199 = vpop.f32.mrb[0].mxu0
    %v200 = vpop.f32.mrb[0].mxu0
    %201 = vdwg.mxu0
    %202 = vmatprep.subr.bf16.mxu0 0
    %203 = vmatpush1.bf16.msra.mxu0 %v147
    %204 = vmatprep.subr.bf16.mxu0 0
    %205 = vmatpush1.bf16.msra.mxu0 %v150
    %206 = vmatprep.subr.bf16.mxu0 0
    %207 = vmatpush1.bf16.msra.mxu0 0
    %208 = vmatprep.subr.bf16.mxu0 0
    %209 = vmatpush1.bf16.msra.mxu0 0
    %210 = vmatprep.subr.bf16.mxu0 0
    %211 = vmatpush1.bf16.msra.mxu0 0
    %212 = vmatprep.subr.bf16.mxu0 0
    %213 = vmatpush1.bf16.msra.mxu0 0
    %214 = vmatprep.subr.bf16.mxu0 0
    %215 = vmatpush1.bf16.msra.mxu0 0
    %216 = vmatprep.subr.bf16.mxu0 0
    %217 = vmatpush1.bf16.msra.mxu0 0
    %218 = vmatprep.subr.bf16.mxu0 0
    %219 = vmatpush1.bf16.msra.mxu0 0
    %220 = vmatprep.subr.bf16.mxu0 0
    %221 = vmatpush1.bf16.msra.mxu0 0
    %222 = vmatprep.subr.bf16.mxu0 0
    %223 = vmatpush1.bf16.msra.mxu0 0
    %224 = vmatprep.subr.bf16.mxu0 0
    %225 = vmatpush1.bf16.msra.mxu0 0
    %226 = vmatprep.subr.bf16.mxu0 0
    %227 = vmatpush1.bf16.msra.mxu0 0
    %228 = vmatprep.subr.bf16.mxu0 0
    %229 = vmatpush1.bf16.msra.mxu0 0
    %230 = vmatprep.subr.bf16.mxu0 0
    %231 = vmatpush1.bf16.msra.mxu0 0
    %232 = vmatprep.subr.bf16.mxu0 0
    %233 = vmatpush1.bf16.msra.mxu0 0
    %234 = vmatprep.mubr.bf16.mxu0 0
    %235 = vmatmul.mubr.bf16.gmra.mrb[0].mxu0 %v159
    %v236 = vpop.f32.mrb[0].mxu0
    %v237 = vadd.f32 %v121, %v236
    %v238 = vpop.f32.mrb[0].mxu0
    %v239 = vpop.f32.mrb[0].mxu0
    %v240 = vpop.f32.mrb[0].mxu0
    %241 = vdwg.mxu0
    %v242 = vxor.u32 %v196, 2147483648
    %v243 = vxor.u32 %v198, 2147483648
    %v244 = vxor.u32 %v237, 2147483648
    %v245 = vmul.f32 %v242, 1.442695
    %v246 = vpow.pop %v245
    %v247 = vmul.f32 %v243, 1.442695
    %v248 = vpow.pop %v247
    %v249 = vmul.f32 %v244, 1.442695
    %v250 = vpow.pop %v249
    %v251 = vadd.f32 %v246, 1.0
    %v252 = vadd.f32 %v248, 1.0
    %v253 = vadd.f32 %v250, 1.0
    %v254 = vrcp.pop %v251
    %v255 = vmul.f32 1.0, %v254
    %v256 = vrcp.pop %v252
    %v257 = vmul.f32 1.0, %v256
    %v258 = vrcp.pop %v253
    %v259 = vmul.f32 1.0, %v258
    %v260 = vmul.f32 %v196, %v255
    %v261 = vmul.f32 %v198, %v257
    %v262 = vmul.f32 %v237, %v259
    %v263 = vld [vmem:[#allocation8] sm:$0xff]
    %v264 = vld [vmem:[#allocation8 + $0x8] sm:$0xf]
    %v265 = vld [vmem:[#allocation8 + $0xc] sm:$0xff]
    %v266 = vld [vmem:[#allocation8 + $0x14] sm:$0xf]
    %v267 = vld [vmem:[#allocation8 + $0x18] sm:$0xff]
    %v268 = vld [vmem:[#allocation8 + $0x20] sm:$0xf]
    %v269 = vld [vmem:[#allocation8 + $0x24] sm:$0xff]
    %v270 = vld [vmem:[#allocation8 + $0x2c] sm:$0xf]
    %v271 = vld [vmem:[#allocation8 + $0x30] sm:$0xff]
    %v272 = vld [vmem:[#allocation8 + $0x38] sm:$0xf]
    %v273 = vld [vmem:[#allocation8 + $0x3c] sm:$0xff]
    %v274 = vld [vmem:[#allocation8 + $0x44] sm:$0xf]
    %v275 = vld [vmem:[#allocation8 + $0x48] sm:$0xff]
    %v276 = vld [vmem:[#allocation8 + $0x50] sm:$0xf]
    %v277 = vld [vmem:[#allocation8 + $0x54] sm:$0xff]
    %v278 = vld [vmem:[#allocation8 + $0x5c] sm:$0xf]
    %v279 = vld [vmem:[#allocation8 + $0x60] sm:$0xff]
    %v280 = vld [vmem:[#allocation8 + $0x68] sm:$0xf]
    %v281 = vld [vmem:[#allocation8 + $0x6c] sm:$0xff]
    %v282 = vld [vmem:[#allocation8 + $0x74] sm:$0xf]
    %v283 = vld [vmem:[#allocation8 + $0x78] sm:$0xff]
    %v284 = vld [vmem:[#allocation8 + $0x80] sm:$0xf]
    %v285 = vld [vmem:[#allocation8 + $0x84] sm:$0xff]
    %v286 = vld [vmem:[#allocation8 + $0x8c] sm:$0xf]
    %v287 = vld [vmem:[#allocation8 + $0x90] sm:$0xff]
    %v288 = vld [vmem:[#allocation8 + $0x98] sm:$0xf]
    %v289 = vld [vmem:[#allocation8 + $0x9c] sm:$0xff]
    %v290 = vld [vmem:[#allocation8 + $0xa4] sm:$0xf]
    %v291 = vld [vmem:[#allocation8 + $0xa8] sm:$0xff]
    %v292 = vld [vmem:[#allocation8 + $0xb0] sm:$0xf]
    %v293 = vld [vmem:[#allocation8 + $0xb4] sm:$0xff]
    %v294 = vld [vmem:[#allocation8 + $0xbc] sm:$0xf]
    %v295 = vld [vmem:[#allocation8 + $0xc0] sm:$0xff]
    %v296 = vld [vmem:[#allocation8 + $0xc8] sm:$0xf]
    %v297 = vld [vmem:[#allocation8 + $0xcc] sm:$0xff]
    %v298 = vld [vmem:[#allocation8 + $0xd4] sm:$0xf]
    %v299 = vld [vmem:[#allocation8 + $0xd8] sm:$0xff]
    %v300 = vld [vmem:[#allocation8 + $0xe0] sm:$0xf]
    %v301 = vld [vmem:[#allocation8 + $0xe4] sm:$0xff]
    %v302 = vld [vmem:[#allocation8 + $0xec] sm:$0xf]
    %v303 = vld [vmem:[#allocation8 + $0xf0] sm:$0xff]
    %v304 = vld [vmem:[#allocation8 + $0xf8] sm:$0xf]
    %v305 = vld [vmem:[#allocation8 + $0xfc] sm:$0xff]
    %v306 = vld [vmem:[#allocation8 + $0x104] sm:$0xf]
    %v307 = vld [vmem:[#allocation8 + $0x108] sm:$0xff]
    %v308 = vld [vmem:[#allocation8 + $0x110] sm:$0xf]
    %v309 = vld [vmem:[#allocation8 + $0x114] sm:$0xff]
    %v310 = vld [vmem:[#allocation8 + $0x11c] sm:$0xf]
    %v311 = vld [vmem:[#allocation8 + $0x120] sm:$0xff]
    %v312 = vld [vmem:[#allocation8 + $0x128] sm:$0xf]
    %v313 = vld [vmem:[#allocation8 + $0x12c] sm:$0xff]
    %v314 = vld [vmem:[#allocation8 + $0x134] sm:$0xf]
    %v315 = vld [vmem:[#allocation8 + $0x138] sm:$0xff]
    %v316 = vld [vmem:[#allocation8 + $0x140] sm:$0xf]
    %v317 = vld [vmem:[#allocation8 + $0x144] sm:$0xff]
    %v318 = vld [vmem:[#allocation8 + $0x14c] sm:$0xf]
    %v319 = vld [vmem:[#allocation8 + $0x150] sm:$0xff]
    %v320 = vld [vmem:[#allocation8 + $0x158] sm:$0xf]
    %v321 = vld [vmem:[#allocation8 + $0x15c] sm:$0xff]
    %v322 = vld [vmem:[#allocation8 + $0x164] sm:$0xf]
    %v323 = vld [vmem:[#allocation8 + $0x168] sm:$0xff]
    %v324 = vld [vmem:[#allocation8 + $0x170] sm:$0xf]
    %v325 = vld [vmem:[#allocation8 + $0x174] sm:$0xff]
    %v326 = vld [vmem:[#allocation8 + $0x17c] sm:$0xf]
    %v327 = vld [vmem:[#allocation8 + $0x180] sm:$0xff]
    %v328 = vld [vmem:[#allocation8 + $0x188] sm:$0xf]
    %v329 = vld [vmem:[#allocation8 + $0x18c] sm:$0xff]
    %v330 = vld [vmem:[#allocation8 + $0x194] sm:$0xf]
    %v331 = vld [vmem:[#allocation8 + $0x198] sm:$0xff]
    %v332 = vld [vmem:[#allocation8 + $0x1a0] sm:$0xf]
    %v333 = vld [vmem:[#allocation8 + $0x1a4] sm:$0xff]
    %v334 = vld [vmem:[#allocation8 + $0x1ac] sm:$0xf]
    %v335 = vld [vmem:[#allocation8 + $0x1b0] sm:$0xff]
    %v336 = vld [vmem:[#allocation8 + $0x1b8] sm:$0xf]
    %v337 = vld [vmem:[#allocation8 + $0x1bc] sm:$0xff]
    %v338 = vld [vmem:[#allocation8 + $0x1c4] sm:$0xf]
    %v339 = vld [vmem:[#allocation8 + $0x1c8] sm:$0xff]
    %v340 = vld [vmem:[#allocation8 + $0x1d0] sm:$0xf]
    %v341 = vld [vmem:[#allocation8 + $0x1d4] sm:$0xff]
    %v342 = vld [vmem:[#allocation8 + $0x1dc] sm:$0xf]
    %v343 = vld [vmem:[#allocation8 + $0x1e0] sm:$0xff]
    %v344 = vld [vmem:[#allocation8 + $0x1e8] sm:$0xf]
    %v345 = vld [vmem:[#allocation8 + $0x1ec] sm:$0xff]
    %v346 = vld [vmem:[#allocation8 + $0x1f4] sm:$0xf]
    %v347 = vld [vmem:[#allocation8 + $0x1f8] sm:$0xff]
    %v348 = vld [vmem:[#allocation8 + $0x200] sm:$0xf]
    %v349 = vld [vmem:[#allocation8 + $0x204] sm:$0xff]
    %v350 = vld [vmem:[#allocation8 + $0x20c] sm:$0xf]
    %v351 = vld [vmem:[#allocation8 + $0x210] sm:$0xff]
    %v352 = vld [vmem:[#allocation8 + $0x218] sm:$0xf]
    %v353 = vld [vmem:[#allocation8 + $0x21c] sm:$0xff]
    %v354 = vld [vmem:[#allocation8 + $0x224] sm:$0xf]
    %v355 = vld [vmem:[#allocation8 + $0x228] sm:$0xff]
    %v356 = vld [vmem:[#allocation8 + $0x230] sm:$0xf]
    %v357 = vld [vmem:[#allocation8 + $0x234] sm:$0xff]
    %v358 = vld [vmem:[#allocation8 + $0x23c] sm:$0xf]
    %v359 = vld [vmem:[%s4] sm:$0x7]
    %v360 = vpack.c.bf16 %v260, %v260
    %v361 = vpack.c.bf16 %v261, %v261
    %v362 = vpack.c.bf16 %v262, %v262
    %v364 = vlaneseq
    %v365 = vshrl.u32 %v364, 7
    %v366 = vsub.s32 0, %v365
    %v367 = vrot.slane %v359, %v366
    %v368 = vlaneseq
    %v369 = vshrl.u32 %v368, 7
    %v370 = vsub.s32 1, %v369
    %v371 = vrot.slane %v359, %v370
    %v372 = vlaneseq
    %v373 = vshrl.u32 %v372, 7
    %v374 = vsub.s32 2, %v373
    %v375 = vrot.slane %v359, %v374
    %v475 = vunpack.c.l.b16 %v263
    %v476 = vunpack.c.h.b16 %v263
    %v477 = vunpack.c.l.b16 %v264
    %v478 = vunpack.c.l.b16 %v265
    %v479 = vunpack.c.h.b16 %v265
    %v480 = vunpack.c.l.b16 %v266
    %v481 = vunpack.c.l.b16 %v267
    %v482 = vunpack.c.h.b16 %v267
    %v483 = vunpack.c.l.b16 %v268
    %v484 = vunpack.c.l.b16 %v269
    %v485 = vunpack.c.h.b16 %v269
    %v486 = vunpack.c.l.b16 %v270
    %v487 = vunpack.c.l.b16 %v271
    %v488 = vunpack.c.h.b16 %v271
    %v489 = vunpack.c.l.b16 %v272
    %v490 = vunpack.c.l.b16 %v273
    %v491 = vunpack.c.h.b16 %v273
    %v492 = vunpack.c.l.b16 %v274
    %v493 = vunpack.c.l.b16 %v275
    %v494 = vunpack.c.h.b16 %v275
    %v495 = vunpack.c.l.b16 %v276
    %v496 = vunpack.c.l.b16 %v277
    %v497 = vunpack.c.h.b16 %v277
    %v498 = vunpack.c.l.b16 %v278
    %v499 = vunpack.c.l.b16 %v279
    %v500 = vunpack.c.h.b16 %v279
    %v501 = vunpack.c.l.b16 %v280
    %v502 = vunpack.c.l.b16 %v281
    %v503 = vunpack.c.h.b16 %v281
    %v504 = vunpack.c.l.b16 %v282
    %v505 = vunpack.c.l.b16 %v283
    %v506 = vunpack.c.h.b16 %v283
    %v507 = vunpack.c.l.b16 %v284
    %v508 = vunpack.c.l.b16 %v285
    %v509 = vunpack.c.h.b16 %v285
    %v510 = vunpack.c.l.b16 %v286
    %v511 = vunpack.c.l.b16 %v287
    %v512 = vunpack.c.h.b16 %v287
    %v513 = vunpack.c.l.b16 %v288
    %v514 = vunpack.c.l.b16 %v289
    %v515 = vunpack.c.h.b16 %v289
    %v516 = vunpack.c.l.b16 %v290
    %v517 = vunpack.c.l.b16 %v291
    %v518 = vunpack.c.h.b16 %v291
    %v519 = vunpack.c.l.b16 %v292
    %v520 = vunpack.c.l.b16 %v293
    %v521 = vunpack.c.h.b16 %v293
    %v522 = vunpack.c.l.b16 %v294
    %v523 = vunpack.c.l.b16 %v295
    %v524 = vunpack.c.h.b16 %v295
    %v525 = vunpack.c.l.b16 %v296
    %v526 = vunpack.c.l.b16 %v297
    %v527 = vunpack.c.h.b16 %v297
    %v528 = vunpack.c.l.b16 %v298
    %v529 = vunpack.c.l.b16 %v299
    %v530 = vunpack.c.h.b16 %v299
    %v531 = vunpack.c.l.b16 %v300
    %v532 = vunpack.c.l.b16 %v301
    %v533 = vunpack.c.h.b16 %v301
    %v534 = vunpack.c.l.b16 %v302
    %v535 = vunpack.c.l.b16 %v303
    %v536 = vunpack.c.h.b16 %v303
    %v537 = vunpack.c.l.b16 %v304
    %v538 = vunpack.c.l.b16 %v305
    %v539 = vunpack.c.h.b16 %v305
    %v540 = vunpack.c.l.b16 %v306
    %v541 = vunpack.c.l.b16 %v307
    %v542 = vunpack.c.h.b16 %v307
    %v543 = vunpack.c.l.b16 %v308
    %v544 = vunpack.c.l.b16 %v309
    %v545 = vunpack.c.h.b16 %v309
    %v546 = vunpack.c.l.b16 %v310
    %v547 = vunpack.c.l.b16 %v311
    %v548 = vunpack.c.h.b16 %v311
    %v549 = vunpack.c.l.b16 %v312
    %v550 = vunpack.c.l.b16 %v313
    %v551 = vunpack.c.h.b16 %v313
    %v552 = vunpack.c.l.b16 %v314
    %v553 = vunpack.c.l.b16 %v315
    %v554 = vunpack.c.h.b16 %v315
    %v555 = vunpack.c.l.b16 %v316
    %v556 = vunpack.c.l.b16 %v317
    %v557 = vunpack.c.h.b16 %v317
    %v558 = vunpack.c.l.b16 %v318
    %v559 = vunpack.c.l.b16 %v319
    %v560 = vunpack.c.h.b16 %v319
    %v561 = vunpack.c.l.b16 %v320
    %v562 = vunpack.c.l.b16 %v321
    %v563 = vunpack.c.h.b16 %v321
    %v564 = vunpack.c.l.b16 %v322
    %v565 = vunpack.c.l.b16 %v323
    %v566 = vunpack.c.h.b16 %v323
    %v567 = vunpack.c.l.b16 %v324
    %v568 = vunpack.c.l.b16 %v325
    %v569 = vunpack.c.h.b16 %v325
    %v570 = vunpack.c.l.b16 %v326
    %v571 = vunpack.c.l.b16 %v327
    %v572 = vunpack.c.h.b16 %v327
    %v573 = vunpack.c.l.b16 %v328
    %v574 = vunpack.c.l.b16 %v329
    %v575 = vunpack.c.h.b16 %v329
    %v576 = vunpack.c.l.b16 %v330
    %v577 = vunpack.c.l.b16 %v331
    %v578 = vunpack.c.h.b16 %v331
    %v579 = vunpack.c.l.b16 %v332
    %v580 = vunpack.c.l.b16 %v333
    %v581 = vunpack.c.h.b16 %v333
    %v582 = vunpack.c.l.b16 %v334
    %v583 = vunpack.c.l.b16 %v335
    %v584 = vunpack.c.h.b16 %v335
    %v585 = vunpack.c.l.b16 %v336
    %v586 = vunpack.c.l.b16 %v337
    %v587 = vunpack.c.h.b16 %v337
    %v588 = vunpack.c.l.b16 %v338
    %v589 = vunpack.c.l.b16 %v339
    %v590 = vunpack.c.h.b16 %v339
    %v591 = vunpack.c.l.b16 %v340
    %v592 = vunpack.c.l.b16 %v341
    %v593 = vunpack.c.h.b16 %v341
    %v594 = vunpack.c.l.b16 %v342
    %v595 = vunpack.c.l.b16 %v343
    %v596 = vunpack.c.h.b16 %v343
    %v597 = vunpack.c.l.b16 %v344
    %v598 = vunpack.c.l.b16 %v345
    %v599 = vunpack.c.h.b16 %v345
    %v600 = vunpack.c.l.b16 %v346
    %v601 = vunpack.c.l.b16 %v347
    %v602 = vunpack.c.h.b16 %v347
    %v603 = vunpack.c.l.b16 %v348
    %v604 = vunpack.c.l.b16 %v349
    %v605 = vunpack.c.h.b16 %v349
    %v606 = vunpack.c.l.b16 %v350
    %v607 = vunpack.c.l.b16 %v351
    %v608 = vunpack.c.h.b16 %v351
    %v609 = vunpack.c.l.b16 %v352
    %v610 = vunpack.c.l.b16 %v353
    %v611 = vunpack.c.h.b16 %v353
    %v612 = vunpack.c.l.b16 %v354
    %v613 = vunpack.c.l.b16 %v355
    %v614 = vunpack.c.h.b16 %v355
    %v615 = vunpack.c.l.b16 %v356
    %v616 = vunpack.c.l.b16 %v357
    %v617 = vunpack.c.h.b16 %v357
    %v618 = vunpack.c.l.b16 %v358
    %v619 = vpack.c.b16 %v478, %v475
    %v620 = vpack.c.b16 %v479, %v476
    %v621 = vpack.c.b16 %v480, %v477
    %v622 = vpack.c.b16 %v484, %v481
    %v623 = vpack.c.b16 %v485, %v482
    %v624 = vpack.c.b16 %v486, %v483
    %v625 = vpack.c.b16 %v490, %v487
    %v626 = vpack.c.b16 %v491, %v488
    %v627 = vpack.c.b16 %v492, %v489
    %v628 = vpack.c.b16 %v496, %v493
    %v629 = vpack.c.b16 %v497, %v494
    %v630 = vpack.c.b16 %v498, %v495
    %v631 = vpack.c.b16 %v502, %v499
    %v632 = vpack.c.b16 %v503, %v500
    %v633 = vpack.c.b16 %v504, %v501
    %v634 = vpack.c.b16 %v508, %v505
    %v635 = vpack.c.b16 %v509, %v506
    %v636 = vpack.c.b16 %v510, %v507
    %v637 = vpack.c.b16 %v514, %v511
    %v638 = vpack.c.b16 %v515, %v512
    %v639 = vpack.c.b16 %v516, %v513
    %v640 = vpack.c.b16 %v520, %v517
    %v641 = vpack.c.b16 %v521, %v518
    %v642 = vpack.c.b16 %v522, %v519
    %v643 = vpack.c.b16 %v526, %v523
    %v644 = vpack.c.b16 %v527, %v524
    %v645 = vpack.c.b16 %v528, %v525
    %v646 = vpack.c.b16 %v532, %v529
    %v647 = vpack.c.b16 %v533, %v530
    %v648 = vpack.c.b16 %v534, %v531
    %v649 = vpack.c.b16 %v538, %v535
    %v650 = vpack.c.b16 %v539, %v536
    %v651 = vpack.c.b16 %v540, %v537
    %v652 = vpack.c.b16 %v544, %v541
    %v653 = vpack.c.b16 %v545, %v542
    %v654 = vpack.c.b16 %v546, %v543
    %v655 = vpack.c.b16 %v550, %v547
    %v656 = vpack.c.b16 %v551, %v548
    %v657 = vpack.c.b16 %v552, %v549
    %v658 = vpack.c.b16 %v556, %v553
    %v659 = vpack.c.b16 %v557, %v554
    %v660 = vpack.c.b16 %v558, %v555
    %v661 = vpack.c.b16 %v562, %v559
    %v662 = vpack.c.b16 %v563, %v560
    %v663 = vpack.c.b16 %v564, %v561
    %v664 = vpack.c.b16 %v568, %v565
    %v665 = vpack.c.b16 %v569, %v566
    %v666 = vpack.c.b16 %v570, %v567
    %v667 = vpack.c.b16 %v574, %v571
    %v668 = vpack.c.b16 %v575, %v572
    %v669 = vpack.c.b16 %v576, %v573
    %v670 = vpack.c.b16 %v580, %v577
    %v671 = vpack.c.b16 %v581, %v578
    %v672 = vpack.c.b16 %v582, %v579
    %v673 = vpack.c.b16 %v586, %v583
    %v674 = vpack.c.b16 %v587, %v584
    %v675 = vpack.c.b16 %v588, %v585
    %v676 = vpack.c.b16 %v592, %v589
    %v677 = vpack.c.b16 %v593, %v590
    %v678 = vpack.c.b16 %v594, %v591
    %v679 = vpack.c.b16 %v598, %v595
    %v680 = vpack.c.b16 %v599, %v596
    %v681 = vpack.c.b16 %v600, %v597
    %v682 = vpack.c.b16 %v604, %v601
    %v683 = vpack.c.b16 %v605, %v602
    %v684 = vpack.c.b16 %v606, %v603
    %v685 = vpack.c.b16 %v610, %v607
    %v686 = vpack.c.b16 %v611, %v608
    %v687 = vpack.c.b16 %v612, %v609
    %v688 = vpack.c.b16 %v616, %v613
    %v689 = vpack.c.b16 %v617, %v614
    %v690 = vpack.c.b16 %v618, %v615
    %763 = vmatprep.subr.bf16.mxu0 %v620
    %764 = vmatpush1.bf16.msra.mxu0 %v619
    %765 = vmatprep.subr.bf16.mxu0 %v623
    %766 = vmatpush1.bf16.msra.mxu0 %v622
    %767 = vmatprep.subr.bf16.mxu0 %v626
    %768 = vmatpush1.bf16.msra.mxu0 %v625
    %769 = vmatprep.subr.bf16.mxu0 %v629
    %770 = vmatpush1.bf16.msra.mxu0 %v628
    %771 = vmatprep.subr.bf16.mxu0 %v632
    %772 = vmatpush1.bf16.msra.mxu0 %v631
    %773 = vmatprep.subr.bf16.mxu0 %v635
    %774 = vmatpush1.bf16.msra.mxu0 %v634
    %775 = vmatprep.subr.bf16.mxu0 %v638
    %776 = vmatpush1.bf16.msra.mxu0 %v637
    %777 = vmatprep.subr.bf16.mxu0 %v641
    %778 = vmatpush1.bf16.msra.mxu0 %v640
    %779 = vmatprep.subr.bf16.mxu0 %v644
    %780 = vmatpush1.bf16.msra.mxu0 %v643
    %781 = vmatprep.subr.bf16.mxu0 %v647
    %782 = vmatpush1.bf16.msra.mxu0 %v646
    %783 = vmatprep.subr.bf16.mxu0 %v650
    %784 = vmatpush1.bf16.msra.mxu0 %v649
    %785 = vmatprep.subr.bf16.mxu0 %v653
    %786 = vmatpush1.bf16.msra.mxu0 %v652
    %787 = vmatprep.subr.bf16.mxu0 %v656
    %788 = vmatpush1.bf16.msra.mxu0 %v655
    %789 = vmatprep.subr.bf16.mxu0 %v659
    %790 = vmatpush1.bf16.msra.mxu0 %v658
    %791 = vmatprep.subr.bf16.mxu0 %v662
    %792 = vmatpush1.bf16.msra.mxu0 %v661
    %793 = vmatprep.subr.bf16.mxu0 %v665
    %794 = vmatpush1.bf16.msra.mxu0 %v664
    %795 = vmatprep.mubr.bf16.mxu0 %v361
    %796 = vmatmul.mubr.bf16.gmra.mrb[0].mxu0 %v360
    %v797 = vpop.f32.mrb[0].mxu0
    %v798 = vadd.f32 %v367, %v797
    %v799 = vpop.f32.mrb[0].mxu0
    %v800 = vadd.f32 %v371, %v799
    %v801 = vpop.f32.mrb[0].mxu0
    %v802 = vpop.f32.mrb[0].mxu0
    %803 = vdwg.mxu0
    %804 = vmatprep.subr.bf16.mxu0 %v668
    %805 = vmatpush1.bf16.msra.mxu0 %v667
    %806 = vmatprep.subr.bf16.mxu0 %v671
    %807 = vmatpush1.bf16.msra.mxu0 %v670
    %808 = vmatprep.subr.bf16.mxu0 %v674
    %809 = vmatpush1.bf16.msra.mxu0 %v673
    %810 = vmatprep.subr.bf16.mxu0 %v677
    %811 = vmatpush1.bf16.msra.mxu0 %v676
    %812 = vmatprep.subr.bf16.mxu0 %v680
    %813 = vmatpush1.bf16.msra.mxu0 %v679
    %814 = vmatprep.subr.bf16.mxu0 %v683
    %815 = vmatpush1.bf16.msra.mxu0 %v682
    %816 = vmatprep.subr.bf16.mxu0 %v686
    %817 = vmatpush1.bf16.msra.mxu0 %v685
    %818 = vmatprep.subr.bf16.mxu0 %v689
    %819 = vmatpush1.bf16.msra.mxu0 %v688
    %820 = vmatprep.subr.bf16.mxu0 0
    %821 = vmatpush1.bf16.msra.mxu0 0
    %822 = vmatprep.subr.bf16.mxu0 0
    %823 = vmatpush1.bf16.msra.mxu0 0
    %824 = vmatprep.subr.bf16.mxu0 0
    %825 = vmatpush1.bf16.msra.mxu0 0
    %826 = vmatprep.subr.bf16.mxu0 0
    %827 = vmatpush1.bf16.msra.mxu0 0
    %828 = vmatprep.subr.bf16.mxu0 0
    %829 = vmatpush1.bf16.msra.mxu0 0
    %830 = vmatprep.subr.bf16.mxu0 0
    %831 = vmatpush1.bf16.msra.mxu0 0
    %832 = vmatprep.subr.bf16.mxu0 0
    %833 = vmatpush1.bf16.msra.mxu0 0
    %834 = vmatprep.subr.bf16.mxu0 0
    %835 = vmatpush1.bf16.msra.mxu0 0
    %836 = vmatprep.mubr.bf16.mxu0 0
    %837 = vmatmul.mubr.bf16.gmra.mrb[0].mxu0 %v362
    %v838 = vpop.f32.mrb[0].mxu0
    %v839 = vadd.f32 %v798, %v838
    %v840 = vpop.f32.mrb[0].mxu0
    %v841 = vadd.f32 %v800, %v840
    %v842 = vpop.f32.mrb[0].mxu0
    %v843 = vpop.f32.mrb[0].mxu0
    %844 = vdwg.mxu0
    %845 = vmatprep.subr.bf16.mxu0 0
    %846 = vmatpush1.bf16.msra.mxu0 %v621
    %847 = vmatprep.subr.bf16.mxu0 0
    %848 = vmatpush1.bf16.msra.mxu0 %v624
    %849 = vmatprep.subr.bf16.mxu0 0
    %850 = vmatpush1.bf16.msra.mxu0 %v627
    %851 = vmatprep.subr.bf16.mxu0 0
    %852 = vmatpush1.bf16.msra.mxu0 %v630
    %853 = vmatprep.subr.bf16.mxu0 0
    %854 = vmatpush1.bf16.msra.mxu0 %v633
    %855 = vmatprep.subr.bf16.mxu0 0
    %856 = vmatpush1.bf16.msra.mxu0 %v636
    %857 = vmatprep.subr.bf16.mxu0 0
    %858 = vmatpush1.bf16.msra.mxu0 %v639
    %859 = vmatprep.subr.bf16.mxu0 0
    %860 = vmatpush1.bf16.msra.mxu0 %v642
    %861 = vmatprep.subr.bf16.mxu0 0
    %862 = vmatpush1.bf16.msra.mxu0 %v645
    %863 = vmatprep.subr.bf16.mxu0 0
    %864 = vmatpush1.bf16.msra.mxu0 %v648
    %865 = vmatprep.subr.bf16.mxu0 0
    %866 = vmatpush1.bf16.msra.mxu0 %v651
    %867 = vmatprep.subr.bf16.mxu0 0
    %868 = vmatpush1.bf16.msra.mxu0 %v654
    %869 = vmatprep.subr.bf16.mxu0 0
    %870 = vmatpush1.bf16.msra.mxu0 %v657
    %871 = vmatprep.subr.bf16.mxu0 0
    %872 = vmatpush1.bf16.msra.mxu0 %v660
    %873 = vmatprep.subr.bf16.mxu0 0
    %874 = vmatpush1.bf16.msra.mxu0 %v663
    %875 = vmatprep.subr.bf16.mxu0 0
    %876 = vmatpush1.bf16.msra.mxu0 %v666
    %877 = vmatprep.mubr.bf16.mxu0 %v361
    %878 = vmatmul.mubr.bf16.gmra.mrb[0].mxu0 %v360
    %v879 = vpop.f32.mrb[0].mxu0
    %v880 = vadd.f32 %v375, %v879
    %v881 = vpop.f32.mrb[0].mxu0
    %v882 = vpop.f32.mrb[0].mxu0
    %v883 = vpop.f32.mrb[0].mxu0
    %884 = vdwg.mxu0
    %885 = vmatprep.subr.bf16.mxu0 0
    %886 = vmatpush1.bf16.msra.mxu0 %v669
    %887 = vmatprep.subr.bf16.mxu0 0
    %888 = vmatpush1.bf16.msra.mxu0 %v672
    %889 = vmatprep.subr.bf16.mxu0 0
    %890 = vmatpush1.bf16.msra.mxu0 %v675
    %891 = vmatprep.subr.bf16.mxu0 0
    %892 = vmatpush1.bf16.msra.mxu0 %v678
    %893 = vmatprep.subr.bf16.mxu0 0
    %894 = vmatpush1.bf16.msra.mxu0 %v681
    %895 = vmatprep.subr.bf16.mxu0 0
    %896 = vmatpush1.bf16.msra.mxu0 %v684
    %897 = vmatprep.subr.bf16.mxu0 0
    %898 = vmatpush1.bf16.msra.mxu0 %v687
    %899 = vmatprep.subr.bf16.mxu0 0
    %900 = vmatpush1.bf16.msra.mxu0 %v690
    %901 = vmatprep.subr.bf16.mxu0 0
    %902 = vmatpush1.bf16.msra.mxu0 0
    %903 = vmatprep.subr.bf16.mxu0 0
    %904 = vmatpush1.bf16.msra.mxu0 0
    %905 = vmatprep.subr.bf16.mxu0 0
    %906 = vmatpush1.bf16.msra.mxu0 0
    %907 = vmatprep.subr.bf16.mxu0 0
    %908 = vmatpush1.bf16.msra.mxu0 0
    %909 = vmatprep.subr.bf16.mxu0 0
    %910 = vmatpush1.bf16.msra.mxu0 0
    %911 = vmatprep.subr.bf16.mxu0 0
    %912 = vmatpush1.bf16.msra.mxu0 0
    %913 = vmatprep.subr.bf16.mxu0 0
    %914 = vmatpush1.bf16.msra.mxu0 0
    %915 = vmatprep.subr.bf16.mxu0 0
    %916 = vmatpush1.bf16.msra.mxu0 0
    %917 = vmatprep.mubr.bf16.mxu0 0
    %918 = vmatmul.mubr.bf16.gmra.mrb[0].mxu0 %v362
    %v919 = vpop.f32.mrb[0].mxu0
    %v920 = vadd.f32 %v880, %v919
    %v921 = vpop.f32.mrb[0].mxu0
    %v922 = vpop.f32.mrb[0].mxu0
    %v923 = vpop.f32.mrb[0].mxu0
    %924 = vdwg.mxu0
    %v925 = vxor.u32 %v839, 2147483648
    %v926 = vxor.u32 %v841, 2147483648
    %v927 = vxor.u32 %v920, 2147483648
    %v928 = vmul.f32 %v925, 1.442695
    %v929 = vpow.pop %v928
    %v930 = vmul.f32 %v926, 1.442695
    %v931 = vpow.pop %v930
    %v932 = vmul.f32 %v927, 1.442695
    %v933 = vpow.pop %v932
    %v934 = vadd.f32 %v929, 1.0
    %v935 = vadd.f32 %v931, 1.0
    %v936 = vadd.f32 %v933, 1.0
    %v937 = vrcp.pop %v934
    %v938 = vmul.f32 1.0, %v937
    %v939 = vrcp.pop %v935
    %v940 = vmul.f32 1.0, %v939
    %v941 = vrcp.pop %v936
    %v942 = vmul.f32 1.0, %v941
    %v943 = vmul.f32 %v839, %v938
    %v944 = vmul.f32 %v841, %v940
    %v945 = vmul.f32 %v920, %v942
    %v946 = vld [vmem:[%s5] sm:$0x7]
    %v947 = vld [vmem:[%s6] sm:$0x7]
    %v948 = vadd.f32 %v943, %v944
    %v949 = vadd.f32 %v948, %v945
    %950 = vadd.xlane.f32.xlu0 %v949
    %v951 = vpop.xlane.xlu0 %950
    %v952 = vmul.f32 %v951, 0.0028571428
    %v953 = vmul.f32 %v943, %v943
    %v954 = vmul.f32 %v944, %v944
    %v955 = vmul.f32 %v945, %v945
    %v956 = vadd.f32 %v953, %v954
    %v957 = vadd.f32 %v956, %v955
    %958 = vadd.xlane.f32.xlu0 %v957
    %v959 = vpop.xlane.xlu0 %958
    %v960 = vmul.f32 %v959, 0.0028571428
    %v961 = vmul.f32 %v952, %v952
    %v962 = vsub.f32 %v960, %v961
    %v963 = vadd.f32 %v962, 1e-05
    %v964 = vrsqrt.pop %v963
    %v965 = vsub.f32 %v943, %v952
    %v966 = vsub.f32 %v944, %v952
    %v967 = vsub.f32 %v945, %v952
    %v968 = vmul.f32 %v965, %v964
    %v969 = vmul.f32 %v966, %v964
    %v970 = vmul.f32 %v967, %v964
    %v972 = vlaneseq
    %v973 = vshrl.u32 %v972, 7
    %v974 = vsub.s32 0, %v973
    %v975 = vrot.slane %v946, %v974
    %v976 = vlaneseq
    %v977 = vshrl.u32 %v976, 7
    %v978 = vsub.s32 1, %v977
    %v979 = vrot.slane %v946, %v978
    %v980 = vlaneseq
    %v981 = vshrl.u32 %v980, 7
    %v982 = vsub.s32 2, %v981
    %v983 = vrot.slane %v946, %v982
    %v987 = vmul.f32 %v968, %v975
    %v988 = vmul.f32 %v969, %v979
    %v989 = vmul.f32 %v970, %v983
    %v991 = vlaneseq
    %v992 = vshrl.u32 %v991, 7
    %v993 = vsub.s32 0, %v992
    %v994 = vrot.slane %v947, %v993
    %v995 = vlaneseq
    %v996 = vshrl.u32 %v995, 7
    %v997 = vsub.s32 1, %v996
    %v998 = vrot.slane %v947, %v997
    %v999 = vlaneseq
    %v1000 = vshrl.u32 %v999, 7
    %v1001 = vsub.s32 2, %v1000
    %v1002 = vrot.slane %v947, %v1001
    %v1006 = vadd.f32 %v987, %v994
    %v1007 = vadd.f32 %v988, %v998
    %v1008 = vadd.f32 %v989, %v1002
    %s1009 = scalar_lea.vmem [#allocation8], 576
    %v1010 = vld [vmem:[%s1009] sm:$0xff]
    %v1011 = vld [vmem:[%s1009 + $0x8] sm:$0xf]
    %v1012 = vld [vmem:[%s1009 + $0xc] sm:$0xff]
    %v1013 = vld [vmem:[%s1009 + $0x14] sm:$0xf]
    %v1014 = vld [vmem:[%s1009 + $0x18] sm:$0xff]
    %v1015 = vld [vmem:[%s1009 + $0x20] sm:$0xf]
    %v1016 = vld [vmem:[%s1009 + $0x24] sm:$0xff]
    %v1017 = vld [vmem:[%s1009 + $0x2c] sm:$0xf]
    %v1018 = vld [vmem:[%s1009 + $0x30] sm:$0xff]
    %v1019 = vld [vmem:[%s1009 + $0x38] sm:$0xf]
    %v1020 = vld [vmem:[%s1009 + $0x3c] sm:$0xff]
    %v1021 = vld [vmem:[%s1009 + $0x44] sm:$0xf]
    %v1022 = vld [vmem:[%s1009 + $0x48] sm:$0xff]
    %v1023 = vld [vmem:[%s1009 + $0x50] sm:$0xf]
    %v1024 = vld [vmem:[%s1009 + $0x54] sm:$0xff]
    %v1025 = vld [vmem:[%s1009 + $0x5c] sm:$0xf]
    %v1026 = vld [vmem:[%s1009 + $0x60] sm:$0xff]
    %v1027 = vld [vmem:[%s1009 + $0x68] sm:$0xf]
    %v1028 = vld [vmem:[%s1009 + $0x6c] sm:$0xff]
    %v1029 = vld [vmem:[%s1009 + $0x74] sm:$0xf]
    %v1030 = vld [vmem:[%s1009 + $0x78] sm:$0xff]
    %v1031 = vld [vmem:[%s1009 + $0x80] sm:$0xf]
    %v1032 = vld [vmem:[%s1009 + $0x84] sm:$0xff]
    %v1033 = vld [vmem:[%s1009 + $0x8c] sm:$0xf]
    %v1034 = vld [vmem:[%s1009 + $0x90] sm:$0xff]
    %v1035 = vld [vmem:[%s1009 + $0x98] sm:$0xf]
    %v1036 = vld [vmem:[%s1009 + $0x9c] sm:$0xff]
    %v1037 = vld [vmem:[%s1009 + $0xa4] sm:$0xf]
    %v1038 = vld [vmem:[%s1009 + $0xa8] sm:$0xff]
    %v1039 = vld [vmem:[%s1009 + $0xb0] sm:$0xf]
    %v1040 = vld [vmem:[%s1009 + $0xb4] sm:$0xff]
    %v1041 = vld [vmem:[%s1009 + $0xbc] sm:$0xf]
    %v1042 = vld [vmem:[%s1009 + $0xc0] sm:$0xff]
    %v1043 = vld [vmem:[%s1009 + $0xc8] sm:$0xf]
    %v1044 = vld [vmem:[%s1009 + $0xcc] sm:$0xff]
    %v1045 = vld [vmem:[%s1009 + $0xd4] sm:$0xf]
    %v1046 = vld [vmem:[%s1009 + $0xd8] sm:$0xff]
    %v1047 = vld [vmem:[%s1009 + $0xe0] sm:$0xf]
    %v1048 = vld [vmem:[%s1009 + $0xe4] sm:$0xff]
    %v1049 = vld [vmem:[%s1009 + $0xec] sm:$0xf]
    %v1050 = vld [vmem:[%s1009 + $0xf0] sm:$0xff]
    %v1051 = vld [vmem:[%s1009 + $0xf8] sm:$0xf]
    %v1052 = vld [vmem:[%s1009 + $0xfc] sm:$0xff]
    %v1053 = vld [vmem:[%s1009 + $0x104] sm:$0xf]
    %v1054 = vld [vmem:[%s1009 + $0x108] sm:$0xff]
    %v1055 = vld [vmem:[%s1009 + $0x110] sm:$0xf]
    %v1056 = vld [vmem:[%s1009 + $0x114] sm:$0xff]
    %v1057 = vld [vmem:[%s1009 + $0x11c] sm:$0xf]
    %v1058 = vld [vmem:[%s1009 + $0x120] sm:$0xff]
    %v1059 = vld [vmem:[%s1009 + $0x128] sm:$0xf]
    %v1060 = vld [vmem:[%s1009 + $0x12c] sm:$0xff]
    %v1061 = vld [vmem:[%s1009 + $0x134] sm:$0xf]
    %v1062 = vld [vmem:[%s1009 + $0x138] sm:$0xff]
    %v1063 = vld [vmem:[%s1009 + $0x140] sm:$0xf]
    %v1064 = vld [vmem:[%s1009 + $0x144] sm:$0xff]
    %v1065 = vld [vmem:[%s1009 + $0x14c] sm:$0xf]
    %v1066 = vld [vmem:[%s1009 + $0x150] sm:$0xff]
    %v1067 = vld [vmem:[%s1009 + $0x158] sm:$0xf]
    %v1068 = vld [vmem:[%s1009 + $0x15c] sm:$0xff]
    %v1069 = vld [vmem:[%s1009 + $0x164] sm:$0xf]
    %v1070 = vld [vmem:[%s1009 + $0x168] sm:$0xff]
    %v1071 = vld [vmem:[%s1009 + $0x170] sm:$0xf]
    %v1072 = vld [vmem:[%s1009 + $0x174] sm:$0xff]
    %v1073 = vld [vmem:[%s1009 + $0x17c] sm:$0xf]
    %v1074 = vld [vmem:[%s1009 + $0x180] sm:$0xff]
    %v1075 = vld [vmem:[%s1009 + $0x188] sm:$0xf]
    %v1076 = vld [vmem:[%s1009 + $0x18c] sm:$0xff]
    %v1077 = vld [vmem:[%s1009 + $0x194] sm:$0xf]
    %v1078 = vld [vmem:[%s1009 + $0x198] sm:$0xff]
    %v1079 = vld [vmem:[%s1009 + $0x1a0] sm:$0xf]
    %v1080 = vld [vmem:[%s1009 + $0x1a4] sm:$0xff]
    %v1081 = vld [vmem:[%s1009 + $0x1ac] sm:$0xf]
    %v1082 = vld [vmem:[%s1009 + $0x1b0] sm:$0xff]
    %v1083 = vld [vmem:[%s1009 + $0x1b8] sm:$0xf]
    %v1084 = vld [vmem:[%s1009 + $0x1bc] sm:$0xff]
    %v1085 = vld [vmem:[%s1009 + $0x1c4] sm:$0xf]
    %v1086 = vld [vmem:[%s1009 + $0x1c8] sm:$0xff]
    %v1087 = vld [vmem:[%s1009 + $0x1d0] sm:$0xf]
    %v1088 = vld [vmem:[%s1009 + $0x1d4] sm:$0xff]
    %v1089 = vld [vmem:[%s1009 + $0x1dc] sm:$0xf]
    %v1090 = vld [vmem:[%s1009 + $0x1e0] sm:$0xff]
    %v1091 = vld [vmem:[%s1009 + $0x1e8] sm:$0xf]
    %v1092 = vld [vmem:[%s1009 + $0x1ec] sm:$0xff]
    %v1093 = vld [vmem:[%s1009 + $0x1f4] sm:$0xf]
    %v1094 = vld [vmem:[%s1009 + $0x1f8] sm:$0xff]
    %v1095 = vld [vmem:[%s1009 + $0x200] sm:$0xf]
    %v1096 = vld [vmem:[%s1009 + $0x204] sm:$0xff]
    %v1097 = vld [vmem:[%s1009 + $0x20c] sm:$0xf]
    %v1098 = vld [vmem:[%s1009 + $0x210] sm:$0xff]
    %v1099 = vld [vmem:[%s1009 + $0x218] sm:$0xf]
    %v1100 = vld [vmem:[%s1009 + $0x21c] sm:$0xff]
    %v1101 = vld [vmem:[%s1009 + $0x224] sm:$0xf]
    %v1102 = vld [vmem:[%s1009 + $0x228] sm:$0xff]
    %v1103 = vld [vmem:[%s1009 + $0x230] sm:$0xf]
    %v1104 = vld [vmem:[%s1009 + $0x234] sm:$0xff]
    %v1105 = vld [vmem:[%s1009 + $0x23c] sm:$0xf]
    %s1106 = scalar_lea.vmem %s4, 3
    %v1107 = vld [vmem:[%s1106] sm:$0x7]
    %v1108 = vpack.c.bf16 %v1006, %v1006
    %v1109 = vpack.c.bf16 %v1007, %v1007
    %v1110 = vpack.c.bf16 %v1008, %v1008
    %v1112 = vlaneseq
    %v1113 = vshrl.u32 %v1112, 7
    %v1114 = vsub.s32 0, %v1113
    %v1115 = vrot.slane %v1107, %v1114
    %v1116 = vlaneseq
    %v1117 = vshrl.u32 %v1116, 7
    %v1118 = vsub.s32 1, %v1117
    %v1119 = vrot.slane %v1107, %v1118
    %v1120 = vlaneseq
    %v1121 = vshrl.u32 %v1120, 7
    %v1122 = vsub.s32 2, %v1121
    %v1123 = vrot.slane %v1107, %v1122
    %v1223 = vunpack.c.l.b16 %v1010
    %v1224 = vunpack.c.h.b16 %v1010
    %v1225 = vunpack.c.l.b16 %v1011
    %v1226 = vunpack.c.l.b16 %v1012
    %v1227 = vunpack.c.h.b16 %v1012
    %v1228 = vunpack.c.l.b16 %v1013
    %v1229 = vunpack.c.l.b16 %v1014
    %v1230 = vunpack.c.h.b16 %v1014
    %v1231 = vunpack.c.l.b16 %v1015
    %v1232 = vunpack.c.l.b16 %v1016
    %v1233 = vunpack.c.h.b16 %v1016
    %v1234 = vunpack.c.l.b16 %v1017
    %v1235 = vunpack.c.l.b16 %v1018
    %v1236 = vunpack.c.h.b16 %v1018
    %v1237 = vunpack.c.l.b16 %v1019
    %v1238 = vunpack.c.l.b16 %v1020
    %v1239 = vunpack.c.h.b16 %v1020
    %v1240 = vunpack.c.l.b16 %v1021
    %v1241 = vunpack.c.l.b16 %v1022
    %v1242 = vunpack.c.h.b16 %v1022
    %v1243 = vunpack.c.l.b16 %v1023
    %v1244 = vunpack.c.l.b16 %v1024
    %v1245 = vunpack.c.h.b16 %v1024
    %v1246 = vunpack.c.l.b16 %v1025
    %v1247 = vunpack.c.l.b16 %v1026
    %v1248 = vunpack.c.h.b16 %v1026
    %v1249 = vunpack.c.l.b16 %v1027
    %v1250 = vunpack.c.l.b16 %v1028
    %v1251 = vunpack.c.h.b16 %v1028
    %v1252 = vunpack.c.l.b16 %v1029
    %v1253 = vunpack.c.l.b16 %v1030
    %v1254 = vunpack.c.h.b16 %v1030
    %v1255 = vunpack.c.l.b16 %v1031
    %v1256 = vunpack.c.l.b16 %v1032
    %v1257 = vunpack.c.h.b16 %v1032
    %v1258 = vunpack.c.l.b16 %v1033
    %v1259 = vunpack.c.l.b16 %v1034
    %v1260 = vunpack.c.h.b16 %v1034
    %v1261 = vunpack.c.l.b16 %v1035
    %v1262 = vunpack.c.l.b16 %v1036
    %v1263 = vunpack.c.h.b16 %v1036
    %v1264 = vunpack.c.l.b16 %v1037
    %v1265 = vunpack.c.l.b16 %v1038
    %v1266 = vunpack.c.h.b16 %v1038
    %v1267 = vunpack.c.l.b16 %v1039
    %v1268 = vunpack.c.l.b16 %v1040
    %v1269 = vunpack.c.h.b16 %v1040
    %v1270 = vunpack.c.l.b16 %v1041
    %v1271 = vunpack.c.l.b16 %v1042
    %v1272 = vunpack.c.h.b16 %v1042
    %v1273 = vunpack.c.l.b16 %v1043
    %v1274 = vunpack.c.l.b16 %v1044
    %v1275 = vunpack.c.h.b16 %v1044
    %v1276 = vunpack.c.l.b16 %v1045
    %v1277 = vunpack.c.l.b16 %v1046
    %v1278 = vunpack.c.h.b16 %v1046
    %v1279 = vunpack.c.l.b16 %v1047
    %v1280 = vunpack.c.l.b16 %v1048
    %v1281 = vunpack.c.h.b16 %v1048
    %v1282 = vunpack.c.l.b16 %v1049
    %v1283 = vunpack.c.l.b16 %v1050
    %v1284 = vunpack.c.h.b16 %v1050
    %v1285 = vunpack.c.l.b16 %v1051
    %v1286 = vunpack.c.l.b16 %v1052
    %v1287 = vunpack.c.h.b16 %v1052
    %v1288 = vunpack.c.l.b16 %v1053
    %v1289 = vunpack.c.l.b16 %v1054
    %v1290 = vunpack.c.h.b16 %v1054
    %v1291 = vunpack.c.l.b16 %v1055
    %v1292 = vunpack.c.l.b16 %v1056
    %v1293 = vunpack.c.h.b16 %v1056
    %v1294 = vunpack.c.l.b16 %v1057
    %v1295 = vunpack.c.l.b16 %v1058
    %v1296 = vunpack.c.h.b16 %v1058
    %v1297 = vunpack.c.l.b16 %v1059
    %v1298 = vunpack.c.l.b16 %v1060
    %v1299 = vunpack.c.h.b16 %v1060
    %v1300 = vunpack.c.l.b16 %v1061
    %v1301 = vunpack.c.l.b16 %v1062
    %v1302 = vunpack.c.h.b16 %v1062
    %v1303 = vunpack.c.l.b16 %v1063
    %v1304 = vunpack.c.l.b16 %v1064
    %v1305 = vunpack.c.h.b16 %v1064
    %v1306 = vunpack.c.l.b16 %v1065
    %v1307 = vunpack.c.l.b16 %v1066
    %v1308 = vunpack.c.h.b16 %v1066
    %v1309 = vunpack.c.l.b16 %v1067
    %v1310 = vunpack.c.l.b16 %v1068
    %v1311 = vunpack.c.h.b16 %v1068
    %v1312 = vunpack.c.l.b16 %v1069
    %v1313 = vunpack.c.l.b16 %v1070
    %v1314 = vunpack.c.h.b16 %v1070
    %v1315 = vunpack.c.l.b16 %v1071
    %v1316 = vunpack.c.l.b16 %v1072
    %v1317 = vunpack.c.h.b16 %v1072
    %v1318 = vunpack.c.l.b16 %v1073
    %v1319 = vunpack.c.l.b16 %v1074
    %v1320 = vunpack.c.h.b16 %v1074
    %v1321 = vunpack.c.l.b16 %v1075
    %v1322 = vunpack.c.l.b16 %v1076
    %v1323 = vunpack.c.h.b16 %v1076
    %v1324 = vunpack.c.l.b16 %v1077
    %v1325 = vunpack.c.l.b16 %v1078
    %v1326 = vunpack.c.h.b16 %v1078
    %v1327 = vunpack.c.l.b16 %v1079
    %v1328 = vunpack.c.l.b16 %v1080
    %v1329 = vunpack.c.h.b16 %v1080
    %v1330 = vunpack.c.l.b16 %v1081
    %v1331 = vunpack.c.l.b16 %v1082
    %v1332 = vunpack.c.h.b16 %v1082
    %v1333 = vunpack.c.l.b16 %v1083
    %v1334 = vunpack.c.l.b16 %v1084
    %v1335 = vunpack.c.h.b16 %v1084
    %v1336 = vunpack.c.l.b16 %v1085
    %v1337 = vunpack.c.l.b16 %v1086
    %v1338 = vunpack.c.h.b16 %v1086
    %v1339 = vunpack.c.l.b16 %v1087
    %v1340 = vunpack.c.l.b16 %v1088
    %v1341 = vunpack.c.h.b16 %v1088
    %v1342 = vunpack.c.l.b16 %v1089
    %v1343 = vunpack.c.l.b16 %v1090
    %v1344 = vunpack.c.h.b16 %v1090
    %v1345 = vunpack.c.l.b16 %v1091
    %v1346 = vunpack.c.l.b16 %v1092
    %v1347 = vunpack.c.h.b16 %v1092
    %v1348 = vunpack.c.l.b16 %v1093
    %v1349 = vunpack.c.l.b16 %v1094
    %v1350 = vunpack.c.h.b16 %v1094
    %v1351 = vunpack.c.l.b16 %v1095
    %v1352 = vunpack.c.l.b16 %v1096
    %v1353 = vunpack.c.h.b16 %v1096
    %v1354 = vunpack.c.l.b16 %v1097
    %v1355 = vunpack.c.l.b16 %v1098
    %v1356 = vunpack.c.h.b16 %v1098
    %v1357 = vunpack.c.l.b16 %v1099
    %v1358 = vunpack.c.l.b16 %v1100
    %v1359 = vunpack.c.h.b16 %v1100
    %v1360 = vunpack.c.l.b16 %v1101
    %v1361 = vunpack.c.l.b16 %v1102
    %v1362 = vunpack.c.h.b16 %v1102
    %v1363 = vunpack.c.l.b16 %v1103
    %v1364 = vunpack.c.l.b16 %v1104
    %v1365 = vunpack.c.h.b16 %v1104
    %v1366 = vunpack.c.l.b16 %v1105
    %v1367 = vpack.c.b16 %v1226, %v1223
    %v1368 = vpack.c.b16 %v1227, %v1224
    %v1369 = vpack.c.b16 %v1228, %v1225
    %v1370 = vpack.c.b16 %v1232, %v1229
    %v1371 = vpack.c.b16 %v1233, %v1230
    %v1372 = vpack.c.b16 %v1234, %v1231
    %v1373 = vpack.c.b16 %v1238, %v1235
    %v1374 = vpack.c.b16 %v1239, %v1236
    %v1375 = vpack.c.b16 %v1240, %v1237
    %v1376 = vpack.c.b16 %v1244, %v1241
    %v1377 = vpack.c.b16 %v1245, %v1242
    %v1378 = vpack.c.b16 %v1246, %v1243
    %v1379 = vpack.c.b16 %v1250, %v1247
    %v1380 = vpack.c.b16 %v1251, %v1248
    %v1381 = vpack.c.b16 %v1252, %v1249
    %v1382 = vpack.c.b16 %v1256, %v1253
    %v1383 = vpack.c.b16 %v1257, %v1254
    %v1384 = vpack.c.b16 %v1258, %v1255
    %v1385 = vpack.c.b16 %v1262, %v1259
    %v1386 = vpack.c.b16 %v1263, %v1260
    %v1387 = vpack.c.b16 %v1264, %v1261
    %v1388 = vpack.c.b16 %v1268, %v1265
    %v1389 = vpack.c.b16 %v1269, %v1266
    %v1390 = vpack.c.b16 %v1270, %v1267
    %v1391 = vpack.c.b16 %v1274, %v1271
    %v1392 = vpack.c.b16 %v1275, %v1272
    %v1393 = vpack.c.b16 %v1276, %v1273
    %v1394 = vpack.c.b16 %v1280, %v1277
    %v1395 = vpack.c.b16 %v1281, %v1278
    %v1396 = vpack.c.b16 %v1282, %v1279
    %v1397 = vpack.c.b16 %v1286, %v1283
    %v1398 = vpack.c.b16 %v1287, %v1284
    %v1399 = vpack.c.b16 %v1288, %v1285
    %v1400 = vpack.c.b16 %v1292, %v1289
    %v1401 = vpack.c.b16 %v1293, %v1290
    %v1402 = vpack.c.b16 %v1294, %v1291
    %v1403 = vpack.c.b16 %v1298, %v1295
    %v1404 = vpack.c.b16 %v1299, %v1296
    %v1405 = vpack.c.b16 %v1300, %v1297
    %v1406 = vpack.c.b16 %v1304, %v1301
    %v1407 = vpack.c.b16 %v1305, %v1302
    %v1408 = vpack.c.b16 %v1306, %v1303
    %v1409 = vpack.c.b16 %v1310, %v1307
    %v1410 = vpack.c.b16 %v1311, %v1308
    %v1411 = vpack.c.b16 %v1312, %v1309
    %v1412 = vpack.c.b16 %v1316, %v1313
    %v1413 = vpack.c.b16 %v1317, %v1314
    %v1414 = vpack.c.b16 %v1318, %v1315
    %v1415 = vpack.c.b16 %v1322, %v1319
    %v1416 = vpack.c.b16 %v1323, %v1320
    %v1417 = vpack.c.b16 %v1324, %v1321
    %v1418 = vpack.c.b16 %v1328, %v1325
    %v1419 = vpack.c.b16 %v1329, %v1326
    %v1420 = vpack.c.b16 %v1330, %v1327
    %v1421 = vpack.c.b16 %v1334, %v1331
    %v1422 = vpack.c.b16 %v1335, %v1332
    %v1423 = vpack.c.b16 %v1336, %v1333
    %v1424 = vpack.c.b16 %v1340, %v1337
    %v1425 = vpack.c.b16 %v1341, %v1338
    %v1426 = vpack.c.b16 %v1342, %v1339
    %v1427 = vpack.c.b16 %v1346, %v1343
    %v1428 = vpack.c.b16 %v1347, %v1344
    %v1429 = vpack.c.b16 %v1348, %v1345
    %v1430 = vpack.c.b16 %v1352, %v1349
    %v1431 = vpack.c.b16 %v1353, %v1350
    %v1432 = vpack.c.b16 %v1354, %v1351
    %v1433 = vpack.c.b16 %v1358, %v1355
    %v1434 = vpack.c.b16 %v1359, %v1356
    %v1435 = vpack.c.b16 %v1360, %v1357
    %v1436 = vpack.c.b16 %v1364, %v1361
    %v1437 = vpack.c.b16 %v1365, %v1362
    %v1438 = vpack.c.b16 %v1366, %v1363
    %1511 = vmatprep.subr.bf16.mxu0 %v1368
    %1512 = vmatpush1.bf16.msra.mxu0 %v1367
    %1513 = vmatprep.subr.bf16.mxu0 %v1371
    %1514 = vmatpush1.bf16.msra.mxu0 %v1370
    %1515 = vmatprep.subr.bf16.mxu0 %v1374
    %1516 = vmatpush1.bf16.msra.mxu0 %v1373
    %1517 = vmatprep.subr.bf16.mxu0 %v1377
    %1518 = vmatpush1.bf16.msra.mxu0 %v1376
    %1519 = vmatprep.subr.bf16.mxu0 %v1380
    %1520 = vmatpush1.bf16.msra.mxu0 %v1379
    %1521 = vmatprep.subr.bf16.mxu0 %v1383
    %1522 = vmatpush1.bf16.msra.mxu0 %v1382
    %1523 = vmatprep.subr.bf16.mxu0 %v1386
    %1524 = vmatpush1.bf16.msra.mxu0 %v1385
    %1525 = vmatprep.subr.bf16.mxu0 %v1389
    %1526 = vmatpush1.bf16.msra.mxu0 %v1388
    %1527 = vmatprep.subr.bf16.mxu0 %v1392
    %1528 = vmatpush1.bf16.msra.mxu0 %v1391
    %1529 = vmatprep.subr.bf16.mxu0 %v1395
    %1530 = vmatpush1.bf16.msra.mxu0 %v1394
    %1531 = vmatprep.subr.bf16.mxu0 %v1398
    %1532 = vmatpush1.bf16.msra.mxu0 %v1397
    %1533 = vmatprep.subr.bf16.mxu0 %v1401
    %1534 = vmatpush1.bf16.msra.mxu0 %v1400
    %1535 = vmatprep.subr.bf16.mxu0 %v1404
    %1536 = vmatpush1.bf16.msra.mxu0 %v1403
    %1537 = vmatprep.subr.bf16.mxu0 %v1407
    %1538 = vmatpush1.bf16.msra.mxu0 %v1406
    %1539 = vmatprep.subr.bf16.mxu0 %v1410
    %1540 = vmatpush1.bf16.msra.mxu0 %v1409
    %1541 = vmatprep.subr.bf16.mxu0 %v1413
    %1542 = vmatpush1.bf16.msra.mxu0 %v1412
    %1543 = vmatprep.mubr.bf16.mxu0 %v1109
    %1544 = vmatmul.mubr.bf16.gmra.mrb[0].mxu0 %v1108
    %v1545 = vpop.f32.mrb[0].mxu0
    %v1546 = vadd.f32 %v1115, %v1545
    %v1547 = vpop.f32.mrb[0].mxu0
    %v1548 = vadd.f32 %v1119, %v1547
    %v1549 = vpop.f32.mrb[0].mxu0
    %v1550 = vpop.f32.mrb[0].mxu0
    %1551 = vdwg.mxu0
    %1552 = vmatprep.subr.bf16.mxu0 %v1416
    %1553 = vmatpush1.bf16.msra.mxu0 %v1415
    %1554 = vmatprep.subr.bf16.mxu0 %v1419
    %1555 = vmatpush1.bf16.msra.mxu0 %v1418
    %1556 = vmatprep.subr.bf16.mxu0 %v1422
    %1557 = vmatpush1.bf16.msra.mxu0 %v1421
    %1558 = vmatprep.subr.bf16.mxu0 %v1425
    %1559 = vmatpush1.bf16.msra.mxu0 %v1424
    %1560 = vmatprep.subr.bf16.mxu0 %v1428
    %1561 = vmatpush1.bf16.msra.mxu0 %v1427
    %1562 = vmatprep.subr.bf16.mxu0 %v1431
    %1563 = vmatpush1.bf16.msra.mxu0 %v1430
    %1564 = vmatprep.subr.bf16.mxu0 %v1434
    %1565 = vmatpush1.bf16.msra.mxu0 %v1433
    %1566 = vmatprep.subr.bf16.mxu0 %v1437
    %1567 = vmatpush1.bf16.msra.mxu0 %v1436
    %1568 = vmatprep.subr.bf16.mxu0 0
    %1569 = vmatpush1.bf16.msra.mxu0 0
    %1570 = vmatprep.subr.bf16.mxu0 0
    %1571 = vmatpush1.bf16.msra.mxu0 0
    %1572 = vmatprep.subr.bf16.mxu0 0
    %1573 = vmatpush1.bf16.msra.mxu0 0
    %1574 = vmatprep.subr.bf16.mxu0 0
    %1575 = vmatpush1.bf16.msra.mxu0 0
    %1576 = vmatprep.subr.bf16.mxu0 0
    %1577 = vmatpush1.bf16.msra.mxu0 0
    %1578 = vmatprep.subr.bf16.mxu0 0
    %1579 = vmatpush1.bf16.msra.mxu0 0
    %1580 = vmatprep.subr.bf16.mxu0 0
    %1581 = vmatpush1.bf16.msra.mxu0 0
    %1582 = vmatprep.subr.bf16.mxu0 0
    %1583 = vmatpush1.bf16.msra.mxu0 0
    %1584 = vmatprep.mubr.bf16.mxu0 0
    %1585 = vmatmul.mubr.bf16.gmra.mrb[0].mxu0 %v1110
    %v1586 = vpop.f32.mrb[0].mxu0
    %v1587 = vadd.f32 %v1546, %v1586
    %v1588 = vpop.f32.mrb[0].mxu0
    %v1589 = vadd.f32 %v1548, %v1588
    %v1590 = vpop.f32.mrb[0].mxu0
    %v1591 = vpop.f32.mrb[0].mxu0
    %1592 = vdwg.mxu0
    %1593 = vmatprep.subr.bf16.mxu0 0
    %1594 = vmatpush1.bf16.msra.mxu0 %v1369
    %1595 = vmatprep.subr.bf16.mxu0 0
    %1596 = vmatpush1.bf16.msra.mxu0 %v1372
    %1597 = vmatprep.subr.bf16.mxu0 0
    %1598 = vmatpush1.bf16.msra.mxu0 %v1375
    %1599 = vmatprep.subr.bf16.mxu0 0
    %1600 = vmatpush1.bf16.msra.mxu0 %v1378
    %1601 = vmatprep.subr.bf16.mxu0 0
    %1602 = vmatpush1.bf16.msra.mxu0 %v1381
    %1603 = vmatprep.subr.bf16.mxu0 0
    %1604 = vmatpush1.bf16.msra.mxu0 %v1384
    %1605 = vmatprep.subr.bf16.mxu0 0
    %1606 = vmatpush1.bf16.msra.mxu0 %v1387
    %1607 = vmatprep.subr.bf16.mxu0 0
    %1608 = vmatpush1.bf16.msra.mxu0 %v1390
    %1609 = vmatprep.subr.bf16.mxu0 0
    %1610 = vmatpush1.bf16.msra.mxu0 %v1393
    %1611 = vmatprep.subr.bf16.mxu0 0
    %1612 = vmatpush1.bf16.msra.mxu0 %v1396
    %1613 = vmatprep.subr.bf16.mxu0 0
    %1614 = vmatpush1.bf16.msra.mxu0 %v1399
    %1615 = vmatprep.subr.bf16.mxu0 0
    %1616 = vmatpush1.bf16.msra.mxu0 %v1402
    %1617 = vmatprep.subr.bf16.mxu0 0
    %1618 = vmatpush1.bf16.msra.mxu0 %v1405
    %1619 = vmatprep.subr.bf16.mxu0 0
    %1620 = vmatpush1.bf16.msra.mxu0 %v1408
    %1621 = vmatprep.subr.bf16.mxu0 0
    %1622 = vmatpush1.bf16.msra.mxu0 %v1411
    %1623 = vmatprep.subr.bf16.mxu0 0
    %1624 = vmatpush1.bf16.msra.mxu0 %v1414
    %1625 = vmatprep.mubr.bf16.mxu0 %v1109
    %1626 = vmatmul.mubr.bf16.gmra.mrb[0].mxu0 %v1108
    %v1627 = vpop.f32.mrb[0].mxu0
    %v1628 = vadd.f32 %v1123, %v1627
    %v1629 = vpop.f32.mrb[0].mxu0
    %v1630 = vpop.f32.mrb[0].mxu0
    %v1631 = vpop.f32.mrb[0].mxu0
    %1632 = vdwg.mxu0
    %1633 = vmatprep.subr.bf16.mxu0 0
    %1634 = vmatpush1.bf16.msra.mxu0 %v1417
    %1635 = vmatprep.subr.bf16.mxu0 0
    %1636 = vmatpush1.bf16.msra.mxu0 %v1420
    %1637 = vmatprep.subr.bf16.mxu0 0
    %1638 = vmatpush1.bf16.msra.mxu0 %v1423
    %1639 = vmatprep.subr.bf16.mxu0 0
    %1640 = vmatpush1.bf16.msra.mxu0 %v1426
    %1641 = vmatprep.subr.bf16.mxu0 0
    %1642 = vmatpush1.bf16.msra.mxu0 %v1429
    %1643 = vmatprep.subr.bf16.mxu0 0
    %1644 = vmatpush1.bf16.msra.mxu0 %v1432
    %1645 = vmatprep.subr.bf16.mxu0 0
    %1646 = vmatpush1.bf16.msra.mxu0 %v1435
    %1647 = vmatprep.subr.bf16.mxu0 0
    %1648 = vmatpush1.bf16.msra.mxu0 %v1438
    %1649 = vmatprep.subr.bf16.mxu0 0
    %1650 = vmatpush1.bf16.msra.mxu0 0
    %1651 = vmatprep.subr.bf16.mxu0 0
    %1652 = vmatpush1.bf16.msra.mxu0 0
    %1653 = vmatprep.subr.bf16.mxu0 0
    %1654 = vmatpush1.bf16.msra.mxu0 0
    %1655 = vmatprep.subr.bf16.mxu0 0
    %1656 = vmatpush1.bf16.msra.mxu0 0
    %1657 = vmatprep.subr.bf16.mxu0 0
    %1658 = vmatpush1.bf16.msra.mxu0 0
    %1659 = vmatprep.subr.bf16.mxu0 0
    %1660 = vmatpush1.bf16.msra.mxu0 0
    %1661 = vmatprep.subr.bf16.mxu0 0
    %1662 = vmatpush1.bf16.msra.mxu0 0
    %1663 = vmatprep.subr.bf16.mxu0 0
    %1664 = vmatpush1.bf16.msra.mxu0 0
    %1665 = vmatprep.mubr.bf16.mxu0 0
    %1666 = vmatmul.mubr.bf16.gmra.mrb[0].mxu0 %v1110
    %v1667 = vpop.f32.mrb[0].mxu0
    %v1668 = vadd.f32 %v1628, %v1667
    %v1669 = vpop.f32.mrb[0].mxu0
    %v1670 = vpop.f32.mrb[0].mxu0
    %v1671 = vpop.f32.mrb[0].mxu0
    %1672 = vdwg.mxu0
    %v1673 = vxor.u32 %v1587, 2147483648
    %v1674 = vxor.u32 %v1589, 2147483648
    %v1675 = vxor.u32 %v1668, 2147483648
    %v1676 = vmul.f32 %v1673, 1.442695
    %v1677 = vpow.pop %v1676
    %v1678 = vmul.f32 %v1674, 1.442695
    %v1679 = vpow.pop %v1678
    %v1680 = vmul.f32 %v1675, 1.442695
    %v1681 = vpow.pop %v1680
    %v1682 = vadd.f32 %v1677, 1.0
    %v1683 = vadd.f32 %v1679, 1.0
    %v1684 = vadd.f32 %v1681, 1.0
    %v1685 = vrcp.pop %v1682
    %v1686 = vmul.f32 1.0, %v1685
    %v1687 = vrcp.pop %v1683
    %v1688 = vmul.f32 1.0, %v1687
    %v1689 = vrcp.pop %v1684
    %v1690 = vmul.f32 1.0, %v1689
    %v1691 = vmul.f32 %v1587, %v1686
    %v1692 = vmul.f32 %v1589, %v1688
    %v1693 = vmul.f32 %v1668, %v1690
    %s1694 = scalar_lea.vmem [#allocation8], 1152
    %v1695 = vld [vmem:[%s1694] sm:$0xff]
    %v1696 = vld [vmem:[%s1694 + $0x8] sm:$0xf]
    %v1697 = vld [vmem:[%s1694 + $0xc] sm:$0xff]
    %v1698 = vld [vmem:[%s1694 + $0x14] sm:$0xf]
    %v1699 = vld [vmem:[%s1694 + $0x18] sm:$0xff]
    %v1700 = vld [vmem:[%s1694 + $0x20] sm:$0xf]
    %v1701 = vld [vmem:[%s1694 + $0x24] sm:$0xff]
    %v1702 = vld [vmem:[%s1694 + $0x2c] sm:$0xf]
    %v1703 = vld [vmem:[%s1694 + $0x30] sm:$0xff]
    %v1704 = vld [vmem:[%s1694 + $0x38] sm:$0xf]
    %v1705 = vld [vmem:[%s1694 + $0x3c] sm:$0xff]
    %v1706 = vld [vmem:[%s1694 + $0x44] sm:$0xf]
    %v1707 = vld [vmem:[%s1694 + $0x48] sm:$0xff]
    %v1708 = vld [vmem:[%s1694 + $0x50] sm:$0xf]
    %v1709 = vld [vmem:[%s1694 + $0x54] sm:$0xff]
    %v1710 = vld [vmem:[%s1694 + $0x5c] sm:$0xf]
    %v1711 = vld [vmem:[%s1694 + $0x60] sm:$0xff]
    %v1712 = vld [vmem:[%s1694 + $0x68] sm:$0xf]
    %v1713 = vld [vmem:[%s1694 + $0x6c] sm:$0xff]
    %v1714 = vld [vmem:[%s1694 + $0x74] sm:$0xf]
    %v1715 = vld [vmem:[%s1694 + $0x78] sm:$0xff]
    %v1716 = vld [vmem:[%s1694 + $0x80] sm:$0xf]
    %v1717 = vld [vmem:[%s1694 + $0x84] sm:$0xff]
    %v1718 = vld [vmem:[%s1694 + $0x8c] sm:$0xf]
    %v1719 = vld [vmem:[%s1694 + $0x90] sm:$0xff]
    %v1720 = vld [vmem:[%s1694 + $0x98] sm:$0xf]
    %v1721 = vld [vmem:[%s1694 + $0x9c] sm:$0xff]
    %v1722 = vld [vmem:[%s1694 + $0xa4] sm:$0xf]
    %v1723 = vld [vmem:[%s1694 + $0xa8] sm:$0xff]
    %v1724 = vld [vmem:[%s1694 + $0xb0] sm:$0xf]
    %v1725 = vld [vmem:[%s1694 + $0xb4] sm:$0xff]
    %v1726 = vld [vmem:[%s1694 + $0xbc] sm:$0xf]
    %v1727 = vld [vmem:[%s1694 + $0xc0] sm:$0xff]
    %v1728 = vld [vmem:[%s1694 + $0xc8] sm:$0xf]
    %v1729 = vld [vmem:[%s1694 + $0xcc] sm:$0xff]
    %v1730 = vld [vmem:[%s1694 + $0xd4] sm:$0xf]
    %v1731 = vld [vmem:[%s1694 + $0xd8] sm:$0xff]
    %v1732 = vld [vmem:[%s1694 + $0xe0] sm:$0xf]
    %v1733 = vld [vmem:[%s1694 + $0xe4] sm:$0xff]
    %v1734 = vld [vmem:[%s1694 + $0xec] sm:$0xf]
    %v1735 = vld [vmem:[%s1694 + $0xf0] sm:$0xff]
    %v1736 = vld [vmem:[%s1694 + $0xf8] sm:$0xf]
    %v1737 = vld [vmem:[%s1694 + $0xfc] sm:$0xff]
    %v1738 = vld [vmem:[%s1694 + $0x104] sm:$0xf]
    %v1739 = vld [vmem:[%s1694 + $0x108] sm:$0xff]
    %v1740 = vld [vmem:[%s1694 + $0x110] sm:$0xf]
    %v1741 = vld [vmem:[%s1694 + $0x114] sm:$0xff]
    %v1742 = vld [vmem:[%s1694 + $0x11c] sm:$0xf]
    %v1743 = vld [vmem:[%s1694 + $0x120] sm:$0xff]
    %v1744 = vld [vmem:[%s1694 + $0x128] sm:$0xf]
    %v1745 = vld [vmem:[%s1694 + $0x12c] sm:$0xff]
    %v1746 = vld [vmem:[%s1694 + $0x134] sm:$0xf]
    %v1747 = vld [vmem:[%s1694 + $0x138] sm:$0xff]
    %v1748 = vld [vmem:[%s1694 + $0x140] sm:$0xf]
    %v1749 = vld [vmem:[%s1694 + $0x144] sm:$0xff]
    %v1750 = vld [vmem:[%s1694 + $0x14c] sm:$0xf]
    %v1751 = vld [vmem:[%s1694 + $0x150] sm:$0xff]
    %v1752 = vld [vmem:[%s1694 + $0x158] sm:$0xf]
    %v1753 = vld [vmem:[%s1694 + $0x15c] sm:$0xff]
    %v1754 = vld [vmem:[%s1694 + $0x164] sm:$0xf]
    %v1755 = vld [vmem:[%s1694 + $0x168] sm:$0xff]
    %v1756 = vld [vmem:[%s1694 + $0x170] sm:$0xf]
    %v1757 = vld [vmem:[%s1694 + $0x174] sm:$0xff]
    %v1758 = vld [vmem:[%s1694 + $0x17c] sm:$0xf]
    %v1759 = vld [vmem:[%s1694 + $0x180] sm:$0xff]
    %v1760 = vld [vmem:[%s1694 + $0x188] sm:$0xf]
    %v1761 = vld [vmem:[%s1694 + $0x18c] sm:$0xff]
    %v1762 = vld [vmem:[%s1694 + $0x194] sm:$0xf]
    %v1763 = vld [vmem:[%s1694 + $0x198] sm:$0xff]
    %v1764 = vld [vmem:[%s1694 + $0x1a0] sm:$0xf]
    %v1765 = vld [vmem:[%s1694 + $0x1a4] sm:$0xff]
    %v1766 = vld [vmem:[%s1694 + $0x1ac] sm:$0xf]
    %v1767 = vld [vmem:[%s1694 + $0x1b0] sm:$0xff]
    %v1768 = vld [vmem:[%s1694 + $0x1b8] sm:$0xf]
    %v1769 = vld [vmem:[%s1694 + $0x1bc] sm:$0xff]
    %v1770 = vld [vmem:[%s1694 + $0x1c4] sm:$0xf]
    %v1771 = vld [vmem:[%s1694 + $0x1c8] sm:$0xff]
    %v1772 = vld [vmem:[%s1694 + $0x1d0] sm:$0xf]
    %v1773 = vld [vmem:[%s1694 + $0x1d4] sm:$0xff]
    %v1774 = vld [vmem:[%s1694 + $0x1dc] sm:$0xf]
    %v1775 = vld [vmem:[%s1694 + $0x1e0] sm:$0xff]
    %v1776 = vld [vmem:[%s1694 + $0x1e8] sm:$0xf]
    %v1777 = vld [vmem:[%s1694 + $0x1ec] sm:$0xff]
    %v1778 = vld [vmem:[%s1694 + $0x1f4] sm:$0xf]
    %v1779 = vld [vmem:[%s1694 + $0x1f8] sm:$0xff]
    %v1780 = vld [vmem:[%s1694 + $0x200] sm:$0xf]
    %v1781 = vld [vmem:[%s1694 + $0x204] sm:$0xff]
    %v1782 = vld [vmem:[%s1694 + $0x20c] sm:$0xf]
    %v1783 = vld [vmem:[%s1694 + $0x210] sm:$0xff]
    %v1784 = vld [vmem:[%s1694 + $0x218] sm:$0xf]
    %v1785 = vld [vmem:[%s1694 + $0x21c] sm:$0xff]
    %v1786 = vld [vmem:[%s1694 + $0x224] sm:$0xf]
    %v1787 = vld [vmem:[%s1694 + $0x228] sm:$0xff]
    %v1788 = vld [vmem:[%s1694 + $0x230] sm:$0xf]
    %v1789 = vld [vmem:[%s1694 + $0x234] sm:$0xff]
    %v1790 = vld [vmem:[%s1694 + $0x23c] sm:$0xf]
    %s1791 = scalar_lea.vmem %s4, 6
    %v1792 = vld [vmem:[%s1791] sm:$0x7]
    %v1793 = vpack.c.bf16 %v1691, %v1691
    %v1794 = vpack.c.bf16 %v1692, %v1692
    %v1795 = vpack.c.bf16 %v1693, %v1693
    %v1797 = vlaneseq
    %v1798 = vshrl.u32 %v1797, 7
    %v1799 = vsub.s32 0, %v1798
    %v1800 = vrot.slane %v1792, %v1799
    %v1801 = vlaneseq
    %v1802 = vshrl.u32 %v1801, 7
    %v1803 = vsub.s32 1, %v1802
    %v1804 = vrot.slane %v1792, %v1803
    %v1805 = vlaneseq
    %v1806 = vshrl.u32 %v1805, 7
    %v1807 = vsub.s32 2, %v1806
    %v1808 = vrot.slane %v1792, %v1807
    %v1908 = vunpack.c.l.b16 %v1695
    %v1909 = vunpack.c.h.b16 %v1695
    %v1910 = vunpack.c.l.b16 %v1696
    %v1911 = vunpack.c.l.b16 %v1697
    %v1912 = vunpack.c.h.b16 %v1697
    %v1913 = vunpack.c.l.b16 %v1698
    %v1914 = vunpack.c.l.b16 %v1699
    %v1915 = vunpack.c.h.b16 %v1699
    %v1916 = vunpack.c.l.b16 %v1700
    %v1917 = vunpack.c.l.b16 %v1701
    %v1918 = vunpack.c.h.b16 %v1701
    %v1919 = vunpack.c.l.b16 %v1702
    %v1920 = vunpack.c.l.b16 %v1703
    %v1921 = vunpack.c.h.b16 %v1703
    %v1922 = vunpack.c.l.b16 %v1704
    %v1923 = vunpack.c.l.b16 %v1705
    %v1924 = vunpack.c.h.b16 %v1705
    %v1925 = vunpack.c.l.b16 %v1706
    %v1926 = vunpack.c.l.b16 %v1707
    %v1927 = vunpack.c.h.b16 %v1707
    %v1928 = vunpack.c.l.b16 %v1708
    %v1929 = vunpack.c.l.b16 %v1709
    %v1930 = vunpack.c.h.b16 %v1709
    %v1931 = vunpack.c.l.b16 %v1710
    %v1932 = vunpack.c.l.b16 %v1711
    %v1933 = vunpack.c.h.b16 %v1711
    %v1934 = vunpack.c.l.b16 %v1712
    %v1935 = vunpack.c.l.b16 %v1713
    %v1936 = vunpack.c.h.b16 %v1713
    %v1937 = vunpack.c.l.b16 %v1714
    %v1938 = vunpack.c.l.b16 %v1715
    %v1939 = vunpack.c.h.b16 %v1715
    %v1940 = vunpack.c.l.b16 %v1716
    %v1941 = vunpack.c.l.b16 %v1717
    %v1942 = vunpack.c.h.b16 %v1717
    %v1943 = vunpack.c.l.b16 %v1718
    %v1944 = vunpack.c.l.b16 %v1719
    %v1945 = vunpack.c.h.b16 %v1719
    %v1946 = vunpack.c.l.b16 %v1720
    %v1947 = vunpack.c.l.b16 %v1721
    %v1948 = vunpack.c.h.b16 %v1721
    %v1949 = vunpack.c.l.b16 %v1722
    %v1950 = vunpack.c.l.b16 %v1723
    %v1951 = vunpack.c.h.b16 %v1723
    %v1952 = vunpack.c.l.b16 %v1724
    %v1953 = vunpack.c.l.b16 %v1725
    %v1954 = vunpack.c.h.b16 %v1725
    %v1955 = vunpack.c.l.b16 %v1726
    %v1956 = vunpack.c.l.b16 %v1727
    %v1957 = vunpack.c.h.b16 %v1727
    %v1958 = vunpack.c.l.b16 %v1728
    %v1959 = vunpack.c.l.b16 %v1729
    %v1960 = vunpack.c.h.b16 %v1729
    %v1961 = vunpack.c.l.b16 %v1730
    %v1962 = vunpack.c.l.b16 %v1731
    %v1963 = vunpack.c.h.b16 %v1731
    %v1964 = vunpack.c.l.b16 %v1732
    %v1965 = vunpack.c.l.b16 %v1733
    %v1966 = vunpack.c.h.b16 %v1733
    %v1967 = vunpack.c.l.b16 %v1734
    %v1968 = vunpack.c.l.b16 %v1735
    %v1969 = vunpack.c.h.b16 %v1735
    %v1970 = vunpack.c.l.b16 %v1736
    %v1971 = vunpack.c.l.b16 %v1737
    %v1972 = vunpack.c.h.b16 %v1737
    %v1973 = vunpack.c.l.b16 %v1738
    %v1974 = vunpack.c.l.b16 %v1739
    %v1975 = vunpack.c.h.b16 %v1739
    %v1976 = vunpack.c.l.b16 %v1740
    %v1977 = vunpack.c.l.b16 %v1741
    %v1978 = vunpack.c.h.b16 %v1741
    %v1979 = vunpack.c.l.b16 %v1742
    %v1980 = vunpack.c.l.b16 %v1743
    %v1981 = vunpack.c.h.b16 %v1743
    %v1982 = vunpack.c.l.b16 %v1744
    %v1983 = vunpack.c.l.b16 %v1745
    %v1984 = vunpack.c.h.b16 %v1745
    %v1985 = vunpack.c.l.b16 %v1746
    %v1986 = vunpack.c.l.b16 %v1747
    %v1987 = vunpack.c.h.b16 %v1747
    %v1988 = vunpack.c.l.b16 %v1748
    %v1989 = vunpack.c.l.b16 %v1749
    %v1990 = vunpack.c.h.b16 %v1749
    %v1991 = vunpack.c.l.b16 %v1750
    %v1992 = vunpack.c.l.b16 %v1751
    %v1993 = vunpack.c.h.b16 %v1751
    %v1994 = vunpack.c.l.b16 %v1752
    %v1995 = vunpack.c.l.b16 %v1753
    %v1996 = vunpack.c.h.b16 %v1753
    %v1997 = vunpack.c.l.b16 %v1754
    %v1998 = vunpack.c.l.b16 %v1755
    %v1999 = vunpack.c.h.b16 %v1755
    %v2000 = vunpack.c.l.b16 %v1756
    %v2001 = vunpack.c.l.b16 %v1757
    %v2002 = vunpack.c.h.b16 %v1757
    %v2003 = vunpack.c.l.b16 %v1758
    %v2004 = vunpack.c.l.b16 %v1759
    %v2005 = vunpack.c.h.b16 %v1759
    %v2006 = vunpack.c.l.b16 %v1760
    %v2007 = vunpack.c.l.b16 %v1761
    %v2008 = vunpack.c.h.b16 %v1761
    %v2009 = vunpack.c.l.b16 %v1762
    %v2010 = vunpack.c.l.b16 %v1763
    %v2011 = vunpack.c.h.b16 %v1763
    %v2012 = vunpack.c.l.b16 %v1764
    %v2013 = vunpack.c.l.b16 %v1765
    %v2014 = vunpack.c.h.b16 %v1765
    %v2015 = vunpack.c.l.b16 %v1766
    %v2016 = vunpack.c.l.b16 %v1767
    %v2017 = vunpack.c.h.b16 %v1767
    %v2018 = vunpack.c.l.b16 %v1768
    %v2019 = vunpack.c.l.b16 %v1769
    %v2020 = vunpack.c.h.b16 %v1769
    %v2021 = vunpack.c.l.b16 %v1770
    %v2022 = vunpack.c.l.b16 %v1771
    %v2023 = vunpack.c.h.b16 %v1771
    %v2024 = vunpack.c.l.b16 %v1772
    %v2025 = vunpack.c.l.b16 %v1773
    %v2026 = vunpack.c.h.b16 %v1773
    %v2027 = vunpack.c.l.b16 %v1774
    %v2028 = vunpack.c.l.b16 %v1775
    %v2029 = vunpack.c.h.b16 %v1775
    %v2030 = vunpack.c.l.b16 %v1776
    %v2031 = vunpack.c.l.b16 %v1777
    %v2032 = vunpack.c.h.b16 %v1777
    %v2033 = vunpack.c.l.b16 %v1778
    %v2034 = vunpack.c.l.b16 %v1779
    %v2035 = vunpack.c.h.b16 %v1779
    %v2036 = vunpack.c.l.b16 %v1780
    %v2037 = vunpack.c.l.b16 %v1781
    %v2038 = vunpack.c.h.b16 %v1781
    %v2039 = vunpack.c.l.b16 %v1782
    %v2040 = vunpack.c.l.b16 %v1783
    %v2041 = vunpack.c.h.b16 %v1783
    %v2042 = vunpack.c.l.b16 %v1784
    %v2043 = vunpack.c.l.b16 %v1785
    %v2044 = vunpack.c.h.b16 %v1785
    %v2045 = vunpack.c.l.b16 %v1786
    %v2046 = vunpack.c.l.b16 %v1787
    %v2047 = vunpack.c.h.b16 %v1787
    %v2048 = vunpack.c.l.b16 %v1788
    %v2049 = vunpack.c.l.b16 %v1789
    %v2050 = vunpack.c.h.b16 %v1789
    %v2051 = vunpack.c.l.b16 %v1790
    %v2052 = vpack.c.b16 %v1911, %v1908
    %v2053 = vpack.c.b16 %v1912, %v1909
    %v2054 = vpack.c.b16 %v1913, %v1910
    %v2055 = vpack.c.b16 %v1917, %v1914
    %v2056 = vpack.c.b16 %v1918, %v1915
    %v2057 = vpack.c.b16 %v1919, %v1916
    %v2058 = vpack.c.b16 %v1923, %v1920
    %v2059 = vpack.c.b16 %v1924, %v1921
    %v2060 = vpack.c.b16 %v1925, %v1922
    %v2061 = vpack.c.b16 %v1929, %v1926
    %v2062 = vpack.c.b16 %v1930, %v1927
    %v2063 = vpack.c.b16 %v1931, %v1928
    %v2064 = vpack.c.b16 %v1935, %v1932
    %v2065 = vpack.c.b16 %v1936, %v1933
    %v2066 = vpack.c.b16 %v1937, %v1934
    %v2067 = vpack.c.b16 %v1941, %v1938
    %v2068 = vpack.c.b16 %v1942, %v1939
    %v2069 = vpack.c.b16 %v1943, %v1940
    %v2070 = vpack.c.b16 %v1947, %v1944
    %v2071 = vpack.c.b16 %v1948, %v1945
    %v2072 = vpack.c.b16 %v1949, %v1946
    %v2073 = vpack.c.b16 %v1953, %v1950
    %v2074 = vpack.c.b16 %v1954, %v1951
    %v2075 = vpack.c.b16 %v1955, %v1952
    %v2076 = vpack.c.b16 %v1959, %v1956
    %v2077 = vpack.c.b16 %v1960, %v1957
    %v2078 = vpack.c.b16 %v1961, %v1958
    %v2079 = vpack.c.b16 %v1965, %v1962
    %v2080 = vpack.c.b16 %v1966, %v1963
    %v2081 = vpack.c.b16 %v1967, %v1964
    %v2082 = vpack.c.b16 %v1971, %v1968
    %v2083 = vpack.c.b16 %v1972, %v1969
    %v2084 = vpack.c.b16 %v1973, %v1970
    %v2085 = vpack.c.b16 %v1977, %v1974
    %v2086 = vpack.c.b16 %v1978, %v1975
    %v2087 = vpack.c.b16 %v1979, %v1976
    %v2088 = vpack.c.b16 %v1983, %v1980
    %v2089 = vpack.c.b16 %v1984, %v1981
    %v2090 = vpack.c.b16 %v1985, %v1982
    %v2091 = vpack.c.b16 %v1989, %v1986
    %v2092 = vpack.c.b16 %v1990, %v1987
    %v2093 = vpack.c.b16 %v1991, %v1988
    %v2094 = vpack.c.b16 %v1995, %v1992
    %v2095 = vpack.c.b16 %v1996, %v1993
    %v2096 = vpack.c.b16 %v1997, %v1994
    %v2097 = vpack.c.b16 %v2001, %v1998
    %v2098 = vpack.c.b16 %v2002, %v1999
    %v2099 = vpack.c.b16 %v2003, %v2000
    %v2100 = vpack.c.b16 %v2007, %v2004
    %v2101 = vpack.c.b16 %v2008, %v2005
    %v2102 = vpack.c.b16 %v2009, %v2006
    %v2103 = vpack.c.b16 %v2013, %v2010
    %v2104 = vpack.c.b16 %v2014, %v2011
    %v2105 = vpack.c.b16 %v2015, %v2012
    %v2106 = vpack.c.b16 %v2019, %v2016
    %v2107 = vpack.c.b16 %v2020, %v2017
    %v2108 = vpack.c.b16 %v2021, %v2018
    %v2109 = vpack.c.b16 %v2025, %v2022
    %v2110 = vpack.c.b16 %v2026, %v2023
    %v2111 = vpack.c.b16 %v2027, %v2024
    %v2112 = vpack.c.b16 %v2031, %v2028
    %v2113 = vpack.c.b16 %v2032, %v2029
    %v2114 = vpack.c.b16 %v2033, %v2030
    %v2115 = vpack.c.b16 %v2037, %v2034
    %v2116 = vpack.c.b16 %v2038, %v2035
    %v2117 = vpack.c.b16 %v2039, %v2036
    %v2118 = vpack.c.b16 %v2043, %v2040
    %v2119 = vpack.c.b16 %v2044, %v2041
    %v2120 = vpack.c.b16 %v2045, %v2042
    %v2121 = vpack.c.b16 %v2049, %v2046
    %v2122 = vpack.c.b16 %v2050, %v2047
    %v2123 = vpack.c.b16 %v2051, %v2048
    %2196 = vmatprep.subr.bf16.mxu0 %v2053
    %2197 = vmatpush1.bf16.msra.mxu0 %v2052
    %2198 = vmatprep.subr.bf16.mxu0 %v2056
    %2199 = vmatpush1.bf16.msra.mxu0 %v2055
    %2200 = vmatprep.subr.bf16.mxu0 %v2059
    %2201 = vmatpush1.bf16.msra.mxu0 %v2058
    %2202 = vmatprep.subr.bf16.mxu0 %v2062
    %2203 = vmatpush1.bf16.msra.mxu0 %v2061
    %2204 = vmatprep.subr.bf16.mxu0 %v2065
    %2205 = vmatpush1.bf16.msra.mxu0 %v2064
    %2206 = vmatprep.subr.bf16.mxu0 %v2068
    %2207 = vmatpush1.bf16.msra.mxu0 %v2067
    %2208 = vmatprep.subr.bf16.mxu0 %v2071
    %2209 = vmatpush1.bf16.msra.mxu0 %v2070
    %2210 = vmatprep.subr.bf16.mxu0 %v2074
    %2211 = vmatpush1.bf16.msra.mxu0 %v2073
    %2212 = vmatprep.subr.bf16.mxu0 %v2077
    %2213 = vmatpush1.bf16.msra.mxu0 %v2076
    %2214 = vmatprep.subr.bf16.mxu0 %v2080
    %2215 = vmatpush1.bf16.msra.mxu0 %v2079
    %2216 = vmatprep.subr.bf16.mxu0 %v2083
    %2217 = vmatpush1.bf16.msra.mxu0 %v2082
    %2218 = vmatprep.subr.bf16.mxu0 %v2086
    %2219 = vmatpush1.bf16.msra.mxu0 %v2085
    %2220 = vmatprep.subr.bf16.mxu0 %v2089
    %2221 = vmatpush1.bf16.msra.mxu0 %v2088
    %2222 = vmatprep.subr.bf16.mxu0 %v2092
    %2223 = vmatpush1.bf16.msra.mxu0 %v2091
    %2224 = vmatprep.subr.bf16.mxu0 %v2095
    %2225 = vmatpush1.bf16.msra.mxu0 %v2094
    %2226 = vmatprep.subr.bf16.mxu0 %v2098
    %2227 = vmatpush1.bf16.msra.mxu0 %v2097
    %2228 = vmatprep.mubr.bf16.mxu0 %v1794
    %2229 = vmatmul.mubr.bf16.gmra.mrb[0].mxu0 %v1793
    %v2230 = vpop.f32.mrb[0].mxu0
    %v2231 = vadd.f32 %v1800, %v2230
    %v2232 = vpop.f32.mrb[0].mxu0
    %v2233 = vadd.f32 %v1804, %v2232
    %v2234 = vpop.f32.mrb[0].mxu0
    %v2235 = vpop.f32.mrb[0].mxu0
    %2236 = vdwg.mxu0
    %2237 = vmatprep.subr.bf16.mxu0 %v2101
    %2238 = vmatpush1.bf16.msra.mxu0 %v2100
    %2239 = vmatprep.subr.bf16.mxu0 %v2104
    %2240 = vmatpush1.bf16.msra.mxu0 %v2103
    %2241 = vmatprep.subr.bf16.mxu0 %v2107
    %2242 = vmatpush1.bf16.msra.mxu0 %v2106
    %2243 = vmatprep.subr.bf16.mxu0 %v2110
    %2244 = vmatpush1.bf16.msra.mxu0 %v2109
    %2245 = vmatprep.subr.bf16.mxu0 %v2113
    %2246 = vmatpush1.bf16.msra.mxu0 %v2112
    %2247 = vmatprep.subr.bf16.mxu0 %v2116
    %2248 = vmatpush1.bf16.msra.mxu0 %v2115
    %2249 = vmatprep.subr.bf16.mxu0 %v2119
    %2250 = vmatpush1.bf16.msra.mxu0 %v2118
    %2251 = vmatprep.subr.bf16.mxu0 %v2122
    %2252 = vmatpush1.bf16.msra.mxu0 %v2121
    %2253 = vmatprep.subr.bf16.mxu0 0
    %2254 = vmatpush1.bf16.msra.mxu0 0
    %2255 = vmatprep.subr.bf16.mxu0 0
    %2256 = vmatpush1.bf16.msra.mxu0 0
    %2257 = vmatprep.subr.bf16.mxu0 0
    %2258 = vmatpush1.bf16.msra.mxu0 0
    %2259 = vmatprep.subr.bf16.mxu0 0
    %2260 = vmatpush1.bf16.msra.mxu0 0
    %2261 = vmatprep.subr.bf16.mxu0 0
    %2262 = vmatpush1.bf16.msra.mxu0 0
    %2263 = vmatprep.subr.bf16.mxu0 0
    %2264 = vmatpush1.bf16.msra.mxu0 0
    %2265 = vmatprep.subr.bf16.mxu0 0
    %2266 = vmatpush1.bf16.msra.mxu0 0
    %2267 = vmatprep.subr.bf16.mxu0 0
    %2268 = vmatpush1.bf16.msra.mxu0 0
    %2269 = vmatprep.mubr.bf16.mxu0 0
    %2270 = vmatmul.mubr.bf16.gmra.mrb[0].mxu0 %v1795
    %v2271 = vpop.f32.mrb[0].mxu0
    %v2272 = vadd.f32 %v2231, %v2271
    %v2273 = vpop.f32.mrb[0].mxu0
    %v2274 = vadd.f32 %v2233, %v2273
    %v2275 = vpop.f32.mrb[0].mxu0
    %v2276 = vpop.f32.mrb[0].mxu0
    %2277 = vdwg.mxu0
    %2278 = vmatprep.subr.bf16.mxu0 0
    %2279 = vmatpush1.bf16.msra.mxu0 %v2054
    %2280 = vmatprep.subr.bf16.mxu0 0
    %2281 = vmatpush1.bf16.msra.mxu0 %v2057
    %2282 = vmatprep.subr.bf16.mxu0 0
    %2283 = vmatpush1.bf16.msra.mxu0 %v2060
    %2284 = vmatprep.subr.bf16.mxu0 0
    %2285 = vmatpush1.bf16.msra.mxu0 %v2063
    %2286 = vmatprep.subr.bf16.mxu0 0
    %2287 = vmatpush1.bf16.msra.mxu0 %v2066
    %2288 = vmatprep.subr.bf16.mxu0 0
    %2289 = vmatpush1.bf16.msra.mxu0 %v2069
    %2290 = vmatprep.subr.bf16.mxu0 0
    %2291 = vmatpush1.bf16.msra.mxu0 %v2072
    %2292 = vmatprep.subr.bf16.mxu0 0
    %2293 = vmatpush1.bf16.msra.mxu0 %v2075
    %2294 = vmatprep.subr.bf16.mxu0 0
    %2295 = vmatpush1.bf16.msra.mxu0 %v2078
    %2296 = vmatprep.subr.bf16.mxu0 0
    %2297 = vmatpush1.bf16.msra.mxu0 %v2081
    %2298 = vmatprep.subr.bf16.mxu0 0
    %2299 = vmatpush1.bf16.msra.mxu0 %v2084
    %2300 = vmatprep.subr.bf16.mxu0 0
    %2301 = vmatpush1.bf16.msra.mxu0 %v2087
    %2302 = vmatprep.subr.bf16.mxu0 0
    %2303 = vmatpush1.bf16.msra.mxu0 %v2090
    %2304 = vmatprep.subr.bf16.mxu0 0
    %2305 = vmatpush1.bf16.msra.mxu0 %v2093
    %2306 = vmatprep.subr.bf16.mxu0 0
    %2307 = vmatpush1.bf16.msra.mxu0 %v2096
    %2308 = vmatprep.subr.bf16.mxu0 0
    %2309 = vmatpush1.bf16.msra.mxu0 %v2099
    %2310 = vmatprep.mubr.bf16.mxu0 %v1794
    %2311 = vmatmul.mubr.bf16.gmra.mrb[0].mxu0 %v1793
    %v2312 = vpop.f32.mrb[0].mxu0
    %v2313 = vadd.f32 %v1808, %v2312
    %v2314 = vpop.f32.mrb[0].mxu0
    %v2315 = vpop.f32.mrb[0].mxu0
    %v2316 = vpop.f32.mrb[0].mxu0
    %2317 = vdwg.mxu0
    %2318 = vmatprep.subr.bf16.mxu0 0
    %2319 = vmatpush1.bf16.msra.mxu0 %v2102
    %2320 = vmatprep.subr.bf16.mxu0 0
    %2321 = vmatpush1.bf16.msra.mxu0 %v2105
    %2322 = vmatprep.subr.bf16.mxu0 0
    %2323 = vmatpush1.bf16.msra.mxu0 %v2108
    %2324 = vmatprep.subr.bf16.mxu0 0
    %2325 = vmatpush1.bf16.msra.mxu0 %v2111
    %2326 = vmatprep.subr.bf16.mxu0 0
    %2327 = vmatpush1.bf16.msra.mxu0 %v2114
    %2328 = vmatprep.subr.bf16.mxu0 0
    %2329 = vmatpush1.bf16.msra.mxu0 %v2117
    %2330 = vmatprep.subr.bf16.mxu0 0
    %2331 = vmatpush1.bf16.msra.mxu0 %v2120
    %2332 = vmatprep.subr.bf16.mxu0 0
    %2333 = vmatpush1.bf16.msra.mxu0 %v2123
    %2334 = vmatprep.subr.bf16.mxu0 0
    %2335 = vmatpush1.bf16.msra.mxu0 0
    %2336 = vmatprep.subr.bf16.mxu0 0
    %2337 = vmatpush1.bf16.msra.mxu0 0
    %2338 = vmatprep.subr.bf16.mxu0 0
    %2339 = vmatpush1.bf16.msra.mxu0 0
    %2340 = vmatprep.subr.bf16.mxu0 0
    %2341 = vmatpush1.bf16.msra.mxu0 0
    %2342 = vmatprep.subr.bf16.mxu0 0
    %2343 = vmatpush1.bf16.msra.mxu0 0
    %2344 = vmatprep.subr.bf16.mxu0 0
    %2345 = vmatpush1.bf16.msra.mxu0 0
    %2346 = vmatprep.subr.bf16.mxu0 0
    %2347 = vmatpush1.bf16.msra.mxu0 0
    %2348 = vmatprep.subr.bf16.mxu0 0
    %2349 = vmatpush1.bf16.msra.mxu0 0
    %2350 = vmatprep.mubr.bf16.mxu0 0
    %2351 = vmatmul.mubr.bf16.gmra.mrb[0].mxu0 %v1795
    %v2352 = vpop.f32.mrb[0].mxu0
    %v2353 = vadd.f32 %v2313, %v2352
    %v2354 = vpop.f32.mrb[0].mxu0
    %v2355 = vpop.f32.mrb[0].mxu0
    %v2356 = vpop.f32.mrb[0].mxu0
    %2357 = vdwg.mxu0
    %v2358 = vxor.u32 %v2272, 2147483648
    %v2359 = vxor.u32 %v2274, 2147483648
    %v2360 = vxor.u32 %v2353, 2147483648
    %v2361 = vmul.f32 %v2358, 1.442695
    %v2362 = vpow.pop %v2361
    %v2363 = vmul.f32 %v2359, 1.442695
    %v2364 = vpow.pop %v2363
    %v2365 = vmul.f32 %v2360, 1.442695
    %v2366 = vpow.pop %v2365
    %v2367 = vadd.f32 %v2362, 1.0
    %v2368 = vadd.f32 %v2364, 1.0
    %v2369 = vadd.f32 %v2366, 1.0
    %v2370 = vrcp.pop %v2367
    %v2371 = vmul.f32 1.0, %v2370
    %v2372 = vrcp.pop %v2368
    %v2373 = vmul.f32 1.0, %v2372
    %v2374 = vrcp.pop %v2369
    %v2375 = vmul.f32 1.0, %v2374
    %v2376 = vmul.f32 %v2272, %v2371
    %v2377 = vmul.f32 %v2274, %v2373
    %v2378 = vmul.f32 %v2353, %v2375
    %s2379 = scalar_lea.vmem %s5, 3
    %v2380 = vld [vmem:[%s2379] sm:$0x7]
    %s2381 = scalar_lea.vmem %s6, 3
    %v2382 = vld [vmem:[%s2381] sm:$0x7]
    %v2383 = vadd.f32 %v2376, %v2377
    %v2384 = vadd.f32 %v2383, %v2378
    %2385 = vadd.xlane.f32.xlu0 %v2384
    %v2386 = vpop.xlane.xlu0 %2385
    %v2387 = vmul.f32 %v2386, 0.0028571428
    %v2388 = vmul.f32 %v2376, %v2376
    %v2389 = vmul.f32 %v2377, %v2377
    %v2390 = vmul.f32 %v2378, %v2378
    %v2391 = vadd.f32 %v2388, %v2389
    %v2392 = vadd.f32 %v2391, %v2390
    %2393 = vadd.xlane.f32.xlu0 %v2392
    %v2394 = vpop.xlane.xlu0 %2393
    %v2395 = vmul.f32 %v2394, 0.0028571428
    %v2396 = vmul.f32 %v2387, %v2387
    %v2397 = vsub.f32 %v2395, %v2396
    %v2398 = vadd.f32 %v2397, 1e-05
    %v2399 = vrsqrt.pop %v2398
    %v2400 = vsub.f32 %v2376, %v2387
    %v2401 = vsub.f32 %v2377, %v2387
    %v2402 = vsub.f32 %v2378, %v2387
    %v2403 = vmul.f32 %v2400, %v2399
    %v2404 = vmul.f32 %v2401, %v2399
    %v2405 = vmul.f32 %v2402, %v2399
    %v2407 = vlaneseq
    %v2408 = vshrl.u32 %v2407, 7
    %v2409 = vsub.s32 0, %v2408
    %v2410 = vrot.slane %v2380, %v2409
    %v2411 = vlaneseq
    %v2412 = vshrl.u32 %v2411, 7
    %v2413 = vsub.s32 1, %v2412
    %v2414 = vrot.slane %v2380, %v2413
    %v2415 = vlaneseq
    %v2416 = vshrl.u32 %v2415, 7
    %v2417 = vsub.s32 2, %v2416
    %v2418 = vrot.slane %v2380, %v2417
    %v2422 = vmul.f32 %v2403, %v2410
    %v2423 = vmul.f32 %v2404, %v2414
    %v2424 = vmul.f32 %v2405, %v2418
    %v2426 = vlaneseq
    %v2427 = vshrl.u32 %v2426, 7
    %v2428 = vsub.s32 0, %v2427
    %v2429 = vrot.slane %v2382, %v2428
    %v2430 = vlaneseq
    %v2431 = vshrl.u32 %v2430, 7
    %v2432 = vsub.s32 1, %v2431
    %v2433 = vrot.slane %v2382, %v2432
    %v2434 = vlaneseq
    %v2435 = vshrl.u32 %v2434, 7
    %v2436 = vsub.s32 2, %v2435
    %v2437 = vrot.slane %v2382, %v2436
    %v2441 = vadd.f32 %v2422, %v2429
    %v2442 = vadd.f32 %v2423, %v2433
    %v2443 = vadd.f32 %v2424, %v2437
    %v2444 = vld [vmem:[#allocation10] sm:$0xf]
    %v2445 = vld [vmem:[#allocation10 + $0x4] sm:$0xf]
    %v2446 = vld [vmem:[#allocation10 + $0x8] sm:$0xf]
    %v2447 = vld [vmem:[#allocation10 + $0xc] sm:$0xf]
    %v2448 = vld [vmem:[#allocation10 + $0x10] sm:$0xf]
    %v2449 = vld [vmem:[#allocation10 + $0x14] sm:$0xf]
    %v2450 = vld [vmem:[#allocation10 + $0x18] sm:$0xf]
    %v2451 = vld [vmem:[#allocation10 + $0x1c] sm:$0xf]
    %v2452 = vld [vmem:[#allocation10 + $0x20] sm:$0xf]
    %v2453 = vld [vmem:[#allocation10 + $0x24] sm:$0xf]
    %v2454 = vld [vmem:[#allocation10 + $0x28] sm:$0xf]
    %v2455 = vld [vmem:[#allocation10 + $0x2c] sm:$0xf]
    %v2456 = vld [vmem:[#allocation10 + $0x30] sm:$0xf]
    %v2457 = vld [vmem:[#allocation10 + $0x34] sm:$0xf]
    %v2458 = vld [vmem:[#allocation10 + $0x38] sm:$0xf]
    %v2459 = vld [vmem:[#allocation10 + $0x3c] sm:$0xf]
    %v2460 = vld [vmem:[#allocation10 + $0x40] sm:$0xf]
    %v2461 = vld [vmem:[#allocation10 + $0x44] sm:$0xf]
    %v2462 = vld [vmem:[#allocation10 + $0x48] sm:$0xf]
    %v2463 = vld [vmem:[#allocation10 + $0x4c] sm:$0xf]
    %v2464 = vld [vmem:[#allocation10 + $0x50] sm:$0xf]
    %v2465 = vld [vmem:[#allocation10 + $0x54] sm:$0xf]
    %v2466 = vld [vmem:[#allocation10 + $0x58] sm:$0xf]
    %v2467 = vld [vmem:[#allocation10 + $0x5c] sm:$0xf]
    %v2468 = vld [vmem:[#allocation10 + $0x60] sm:$0xf]
    %v2469 = vld [vmem:[#allocation10 + $0x64] sm:$0xf]
    %v2470 = vld [vmem:[#allocation10 + $0x68] sm:$0xf]
    %v2471 = vld [vmem:[#allocation10 + $0x6c] sm:$0xf]
    %v2472 = vld [vmem:[#allocation10 + $0x70] sm:$0xf]
    %v2473 = vld [vmem:[#allocation10 + $0x74] sm:$0xf]
    %v2474 = vld [vmem:[#allocation10 + $0x78] sm:$0xf]
    %v2475 = vld [vmem:[#allocation10 + $0x7c] sm:$0xf]
    %v2476 = vld [vmem:[#allocation10 + $0x80] sm:$0xf]
    %v2477 = vld [vmem:[#allocation10 + $0x84] sm:$0xf]
    %v2478 = vld [vmem:[#allocation10 + $0x88] sm:$0xf]
    %v2479 = vld [vmem:[#allocation10 + $0x8c] sm:$0xf]
    %v2480 = vld [vmem:[#allocation10 + $0x90] sm:$0xf]
    %v2481 = vld [vmem:[#allocation10 + $0x94] sm:$0xf]
    %v2482 = vld [vmem:[#allocation10 + $0x98] sm:$0xf]
    %v2483 = vld [vmem:[#allocation10 + $0x9c] sm:$0xf]
    %v2484 = vld [vmem:[#allocation10 + $0xa0] sm:$0xf]
    %v2485 = vld [vmem:[#allocation10 + $0xa4] sm:$0xf]
    %v2486 = vld [vmem:[#allocation10 + $0xa8] sm:$0xf]
    %v2487 = vld [vmem:[#allocation10 + $0xac] sm:$0xf]
    %v2488 = vld [vmem:[#allocation10 + $0xb0] sm:$0xf]
    %v2489 = vld [vmem:[#allocation10 + $0xb4] sm:$0xf]
    %v2490 = vld [vmem:[#allocation10 + $0xb8] sm:$0xf]
    %v2491 = vld [vmem:[#allocation10 + $0xbc] sm:$0xf]
    %v2492 = vld [vmem:[%s8] sm:$0x1]
    %v2493 = vpack.c.bf16 %v2441, %v2441
    %v2494 = vpack.c.bf16 %v2442, %v2442
    %v2495 = vpack.c.bf16 %v2443, %v2443
    %v2497 = vlaneseq
    %v2498 = vshrl.u32 %v2497, 7
    %v2499 = vsub.s32 0, %v2498
    %v2500 = vrot.slane %v2492, %v2499
    %v2550 = vunpack.c.l.b16 %v2444
    %v2551 = vunpack.c.l.b16 %v2445
    %v2552 = vunpack.c.l.b16 %v2446
    %v2553 = vunpack.c.l.b16 %v2447
    %v2554 = vunpack.c.l.b16 %v2448
    %v2555 = vunpack.c.l.b16 %v2449
    %v2556 = vunpack.c.l.b16 %v2450
    %v2557 = vunpack.c.l.b16 %v2451
    %v2558 = vunpack.c.l.b16 %v2452
    %v2559 = vunpack.c.l.b16 %v2453
    %v2560 = vunpack.c.l.b16 %v2454
    %v2561 = vunpack.c.l.b16 %v2455
    %v2562 = vunpack.c.l.b16 %v2456
    %v2563 = vunpack.c.l.b16 %v2457
    %v2564 = vunpack.c.l.b16 %v2458
    %v2565 = vunpack.c.l.b16 %v2459
    %v2566 = vunpack.c.l.b16 %v2460
    %v2567 = vunpack.c.l.b16 %v2461
    %v2568 = vunpack.c.l.b16 %v2462
    %v2569 = vunpack.c.l.b16 %v2463
    %v2570 = vunpack.c.l.b16 %v2464
    %v2571 = vunpack.c.l.b16 %v2465
    %v2572 = vunpack.c.l.b16 %v2466
    %v2573 = vunpack.c.l.b16 %v2467
    %v2574 = vunpack.c.l.b16 %v2468
    %v2575 = vunpack.c.l.b16 %v2469
    %v2576 = vunpack.c.l.b16 %v2470
    %v2577 = vunpack.c.l.b16 %v2471
    %v2578 = vunpack.c.l.b16 %v2472
    %v2579 = vunpack.c.l.b16 %v2473
    %v2580 = vunpack.c.l.b16 %v2474
    %v2581 = vunpack.c.l.b16 %v2475
    %v2582 = vunpack.c.l.b16 %v2476
    %v2583 = vunpack.c.l.b16 %v2477
    %v2584 = vunpack.c.l.b16 %v2478
    %v2585 = vunpack.c.l.b16 %v2479
    %v2586 = vunpack.c.l.b16 %v2480
    %v2587 = vunpack.c.l.b16 %v2481
    %v2588 = vunpack.c.l.b16 %v2482
    %v2589 = vunpack.c.l.b16 %v2483
    %v2590 = vunpack.c.l.b16 %v2484
    %v2591 = vunpack.c.l.b16 %v2485
    %v2592 = vunpack.c.l.b16 %v2486
    %v2593 = vunpack.c.l.b16 %v2487
    %v2594 = vunpack.c.l.b16 %v2488
    %v2595 = vunpack.c.l.b16 %v2489
    %v2596 = vunpack.c.l.b16 %v2490
    %v2597 = vunpack.c.l.b16 %v2491
    %v2598 = vpack.c.b16 %v2551, %v2550
    %v2599 = vpack.c.b16 %v2553, %v2552
    %v2600 = vpack.c.b16 %v2555, %v2554
    %v2601 = vpack.c.b16 %v2557, %v2556
    %v2602 = vpack.c.b16 %v2559, %v2558
    %v2603 = vpack.c.b16 %v2561, %v2560
    %v2604 = vpack.c.b16 %v2563, %v2562
    %v2605 = vpack.c.b16 %v2565, %v2564
    %v2606 = vpack.c.b16 %v2567, %v2566
    %v2607 = vpack.c.b16 %v2569, %v2568
    %v2608 = vpack.c.b16 %v2571, %v2570
    %v2609 = vpack.c.b16 %v2573, %v2572
    %v2610 = vpack.c.b16 %v2575, %v2574
    %v2611 = vpack.c.b16 %v2577, %v2576
    %v2612 = vpack.c.b16 %v2579, %v2578
    %v2613 = vpack.c.b16 %v2581, %v2580
    %v2614 = vpack.c.b16 %v2583, %v2582
    %v2615 = vpack.c.b16 %v2585, %v2584
    %v2616 = vpack.c.b16 %v2587, %v2586
    %v2617 = vpack.c.b16 %v2589, %v2588
    %v2618 = vpack.c.b16 %v2591, %v2590
    %v2619 = vpack.c.b16 %v2593, %v2592
    %v2620 = vpack.c.b16 %v2595, %v2594
    %v2621 = vpack.c.b16 %v2597, %v2596
    %2646 = vmatprep.subr.bf16.mxu0 0
    %2647 = vmatpush1.bf16.msra.mxu0 %v2598
    %2648 = vmatprep.subr.bf16.mxu0 0
    %2649 = vmatpush1.bf16.msra.mxu0 %v2599
    %2650 = vmatprep.subr.bf16.mxu0 0
    %2651 = vmatpush1.bf16.msra.mxu0 %v2600
    %2652 = vmatprep.subr.bf16.mxu0 0
    %2653 = vmatpush1.bf16.msra.mxu0 %v2601
    %2654 = vmatprep.subr.bf16.mxu0 0
    %2655 = vmatpush1.bf16.msra.mxu0 %v2602
    %2656 = vmatprep.subr.bf16.mxu0 0
    %2657 = vmatpush1.bf16.msra.mxu0 %v2603
    %2658 = vmatprep.subr.bf16.mxu0 0
    %2659 = vmatpush1.bf16.msra.mxu0 %v2604
    %2660 = vmatprep.subr.bf16.mxu0 0
    %2661 = vmatpush1.bf16.msra.mxu0 %v2605
    %2662 = vmatprep.subr.bf16.mxu0 0
    %2663 = vmatpush1.bf16.msra.mxu0 %v2606
    %2664 = vmatprep.subr.bf16.mxu0 0
    %2665 = vmatpush1.bf16.msra.mxu0 %v2607
    %2666 = vmatprep.subr.bf16.mxu0 0
    %2667 = vmatpush1.bf16.msra.mxu0 %v2608
    %2668 = vmatprep.subr.bf16.mxu0 0
    %2669 = vmatpush1.bf16.msra.mxu0 %v2609
    %2670 = vmatprep.subr.bf16.mxu0 0
    %2671 = vmatpush1.bf16.msra.mxu0 %v2610
    %2672 = vmatprep.subr.bf16.mxu0 0
    %2673 = vmatpush1.bf16.msra.mxu0 %v2611
    %2674 = vmatprep.subr.bf16.mxu0 0
    %2675 = vmatpush1.bf16.msra.mxu0 %v2612
    %2676 = vmatprep.subr.bf16.mxu0 0
    %2677 = vmatpush1.bf16.msra.mxu0 %v2613
    %2678 = vmatprep.mubr.bf16.mxu0 %v2494
    %2679 = vmatmul.mubr.bf16.gmra.mrb[0].mxu0 %v2493
    %v2680 = vpop.f32.mrb[0].mxu0
    %v2681 = vadd.f32 %v2500, %v2680
    %v2682 = vpop.f32.mrb[0].mxu0
    %v2683 = vpop.f32.mrb[0].mxu0
    %v2684 = vpop.f32.mrb[0].mxu0
    %2685 = vdwg.mxu0
    %2686 = vmatprep.subr.bf16.mxu0 0
    %2687 = vmatpush1.bf16.msra.mxu0 %v2614
    %2688 = vmatprep.subr.bf16.mxu0 0
    %2689 = vmatpush1.bf16.msra.mxu0 %v2615
    %2690 = vmatprep.subr.bf16.mxu0 0
    %2691 = vmatpush1.bf16.msra.mxu0 %v2616
    %2692 = vmatprep.subr.bf16.mxu0 0
    %2693 = vmatpush1.bf16.msra.mxu0 %v2617
    %2694 = vmatprep.subr.bf16.mxu0 0
    %2695 = vmatpush1.bf16.msra.mxu0 %v2618
    %2696 = vmatprep.subr.bf16.mxu0 0
    %2697 = vmatpush1.bf16.msra.mxu0 %v2619
    %2698 = vmatprep.subr.bf16.mxu0 0
    %2699 = vmatpush1.bf16.msra.mxu0 %v2620
    %2700 = vmatprep.subr.bf16.mxu0 0
    %2701 = vmatpush1.bf16.msra.mxu0 %v2621
    %2702 = vmatprep.subr.bf16.mxu0 0
    %2703 = vmatpush1.bf16.msra.mxu0 0
    %2704 = vmatprep.subr.bf16.mxu0 0
    %2705 = vmatpush1.bf16.msra.mxu0 0
    %2706 = vmatprep.subr.bf16.mxu0 0
    %2707 = vmatpush1.bf16.msra.mxu0 0
    %2708 = vmatprep.subr.bf16.mxu0 0
    %2709 = vmatpush1.bf16.msra.mxu0 0
    %2710 = vmatprep.subr.bf16.mxu0 0
    %2711 = vmatpush1.bf16.msra.mxu0 0
    %2712 = vmatprep.subr.bf16.mxu0 0
    %2713 = vmatpush1.bf16.msra.mxu0 0
    %2714 = vmatprep.subr.bf16.mxu0 0
    %2715 = vmatpush1.bf16.msra.mxu0 0
    %2716 = vmatprep.subr.bf16.mxu0 0
    %2717 = vmatpush1.bf16.msra.mxu0 0
    %2718 = vmatprep.mubr.bf16.mxu0 0
    %2719 = vmatmul.mubr.bf16.gmra.mrb[0].mxu0 %v2495
    %v2720 = vpop.f32.mrb[0].mxu0
    %v2721 = vadd.f32 %v2681, %v2720
    %v2722 = vpop.f32.mrb[0].mxu0
    %v2723 = vpop.f32.mrb[0].mxu0
    %v2724 = vpop.f32.mrb[0].mxu0
    %2725 = vdwg.mxu0
    %2726 = vst [vmem:[#allocation11] sm:$0xff] %v2721
    // Predicated region
    $region58: #{mlp_forward.1} parent=1 // pred_check
      _
    $region59: #{mlp_forward.1} parent=1 // pred_check_branch
      %2728 = sbr.rel (0) target = $region61
    $region60: #{mlp_forward.1} parent=1 // pred_region
      %s2730 = ssub.s32 128, 128
      %2731 = vsyncadd [#allocation4], %s2730
      %s2733 = sshll.u32 [#allocation11], 4
      %s2734 = int_to_ptr.vmem [resolvable:$true] %s2733
      %2736 = dma.vmem_to_hbm [thread:$0]  %s2734, 128, %s9, [#allocation4]
    $region61: #{mlp_forward.1} parent=1 // pred_fallthru
      _
    // Predicated region
    $region62: #{mlp_forward.1} parent=1 // pred_check
      _
    $region63: #{mlp_forward.1} parent=1 // pred_check_branch
      %2738 = sbr.rel (0) target = $region65
    $region64: #{mlp_forward.1} parent=1 // pred_region
      %2739 = dma.done [#allocation4], 128
    $region65: #{mlp_forward.1} parent=1 // pred_fallthru
      _
    %2740 = vsyncpa [#allocation3], 1
    %2741 = vsyncpa [#allocation6], 1
    %2742 = vsyncpa [#allocation9], 1
    %2743 = vsyncpa [#allocation4], 1

</llo_original>
